<compile_context>
chip_gen: v7x
topology: tpu7x:2x2x1
jax: 0.10.0
libtpu: 0.0.40
codegen_flags: <defaults>
</compile_context>

<pallas_src>
import jax
import jax.numpy as jnp
from jax.experimental import pallas as pl
from jax.experimental.pallas import tpu as pltpu


_TILE_B = 1024     # rows per grid step (multiple of 8); ~15-20 MiB live VMEM per step


def _round_up(x, m):
    return ((x + m - 1) // m) * m


def _vmem_limit_bytes():
    # ~75% of physical VMEM, capped: v5e/v6e (128 MiB phys) -> 96 MiB, v7x (64 MiB) -> 48 MiB.
    try:
        cap = int(pltpu.get_tpu_info().vmem_capacity_bytes)
        if cap <= 0:
            raise ValueError("bad vmem capacity")
        return max(min((cap * 3) // 4, 112 * 1024 * 1024), 32 * 1024 * 1024)
    except Exception:
        return 48 * 1024 * 1024   # safe on every generation (v7x physical is 64 MiB)


# ---------------------------------------------------------------------------
# Pallas kernel: SHAQ alpha estimate for one tile of B rows.
# ---------------------------------------------------------------------------
def _shaq_kernel(states_ref, qcq_ref, w_fused_ref, b_fused_ref, w_b2b_ref,
                 expand_ref, sel_ref, b_b2b_ref, alpha_ref):
    lanes, n_agents = sel_ref.shape                  # A*E, A
    embed = lanes // n_agents
    n_samples = expand_ref.shape[0] // n_agents - 1
    tb = states_ref.shape[0]

    # ---- fused hypernetwork: one (TB, D) @ (D, 4*A*E + E) MXU matmul --------
    h = jnp.dot(states_ref[...], w_fused_ref[...],
                preferred_element_type=jnp.float32) + b_fused_ref[...]
    w1c = jnp.abs(h[:, 0 * lanes:1 * lanes])        # |w1| coalition half, agent-tiled
    w1i = jnp.abs(h[:, 1 * lanes:2 * lanes])        # |w1| individual half, agent-tiled
    b1 = h[:, 2 * lanes:3 * lanes]
    wf = jnp.abs(h[:, 3 * lanes:4 * lanes])
    h2 = jnp.maximum(h[:, 4 * lanes:4 * lanes + embed], 0.0)
    b2 = (jnp.sum(h2 * w_b2b_ref[...], axis=-1, keepdims=True)
          + b_b2b_ref[0, 0])                                            # (TB, 1)
    b2a = jnp.broadcast_to(b2, (tb, n_agents))                          # hoisted broadcast

    # ---- expand [qc | qi] to the lane-dense per-sample A*E layout -----------
    # One (TB, (S+1)*A) @ ((S+1)*A, (S+1)*A*E) 0/1 MXU GEMM; every per-sample
    # slice below is a static, 128-lane-aligned slice (no relayouts).
    qx = jnp.dot(qcq_ref[...], expand_ref[...], preferred_element_type=jnp.float32)
    qir = qx[:, n_samples * lanes:(n_samples + 1) * lanes]              # individual q, (TB, A*E)
    base = qir * w1i + b1                                               # sample-invariant term

    sel = sel_ref[...]
    acc = jnp.zeros((tb, n_agents), jnp.float32)
    # Static unroll over the (small) sample axis: the whole ELU hot path stays
    # 2-D (TB, A*E), so per-row hypernet terms need no sublane broadcasts.
    # TODO(synk): optionally run this elementwise chain in bfloat16 on v6e/v7x.
    for s in range(n_samples):
        qcr = qx[:, s * lanes:(s + 1) * lanes]
        pre = qcr * w1c + base
        # TODO(synk): switch to jnp.expm1 once Mosaic lowers lax.expm1_p.
        hidden = jnp.where(pre > 0.0, pre, jnp.exp(pre) - 1.0)
        y = jnp.dot(hidden * wf, sel, preferred_element_type=jnp.float32)   # (TB, A)
        acc = acc + jnp.abs(y + b2a)
    alpha_ref[...] = acc * (1.0 / n_samples) + 1.0                      # (TB, A)  (alpha + 1)


# ---------------------------------------------------------------------------
# Module wrapper
# ---------------------------------------------------------------------------
class SHAQMixerPallas:
    """JAX/Pallas port of SHAQMixer (hypernet_layers == 1 path)."""

    def __init__(self, n_agents, state_dim, embed_dim, n_actions, sample_size, key):
        self.n_agents = n_agents
        self.state_dim = state_dim
        self.embed_dim = embed_dim
        self.n_actions = n_actions
        self.sample_size = sample_size
        self._vmem_limit = _vmem_limit_bytes()

        def linear(k, fan_in, fan_out):
            kw, kb = jax.random.split(k)
            bound = 1.0 / (fan_in ** 0.5)
            w = jax.random.uniform(kw, (fan_in, fan_out), jnp.float32, -bound, bound)
            b = jax.random.uniform(kb, (1, fan_out), jnp.float32, -bound, bound)
            return w, b

        ks = jax.random.split(key, 5)
        # hyper_w_1: Linear(state_dim, 2*embed_dim)  (coalition / individual halves)
        w_w1, b_w1 = linear(ks[0], state_dim, 2 * embed_dim)
        self.w_w1c, self.b_w1c = w_w1[:, :embed_dim], b_w1[:, :embed_dim]
        self.w_w1i, self.b_w1i = w_w1[:, embed_dim:], b_w1[:, embed_dim:]
        # hyper_w_final: Linear(state_dim, embed_dim)
        self.w_wf, self.b_wf = linear(ks[1], state_dim, embed_dim)
        # hyper_b_1: Linear(state_dim, embed_dim)
        self.w_b1, self.b_b1 = linear(ks[2], state_dim, embed_dim)
        # hyper_b_2: Linear(state_dim, embed_dim) -> ReLU -> Linear(embed_dim, 1)
        self.w_b2a, self.b_b2a = linear(ks[3], state_dim, embed_dim)
        self.w_b2b, self.b_b2b = linear(ks[4], embed_dim, 1)

        # ---- kernel-side parameter packing ---------------------------------
        a, e = n_agents, embed_dim
        lanes = a * e

        def tile_a(x):   # (D, E) -> (D, A*E): lane a*E + e holds column e
            return jnp.tile(x, (1, a))

        self.w_fused = jnp.concatenate(
            [tile_a(self.w_w1c), tile_a(self.w_w1i), tile_a(self.w_b1),
             tile_a(self.w_wf), self.w_b2a], axis=1)                # (D, 4*A*E + E)
        self.b_fused = jnp.concatenate(
            [tile_a(self.b_w1c), tile_a(self.b_w1i), tile_a(self.b_b1),
             tile_a(self.b_wf), self.b_b2a], axis=1)                # (1, 4*A*E + E)
        self.w_b2b_t = self.w_b2b.T                                 # (1, E)

        # 0/1 expand matrix for the flattened [qc | qi] input: column c = s*A + a
        # (or S*A + a for the individual q) feeds lanes c*E .. (c+1)*E - 1.
        n_cols = (sample_size + 1) * a
        lane_col = jnp.arange(n_cols * e) // e
        self.expand_mat = (lane_col[None, :] ==
                           jnp.arange(n_cols)[:, None]).astype(jnp.float32)  # ((S+1)*A, (S+1)*A*E)
        # 0/1 per-agent reduce matrix for the lane-dense A*E layout.
        agent_of_lane = jnp.arange(lanes) // e
        self.sel_mat = (agent_of_lane[:, None] ==
                        jnp.arange(a)[None, :]).astype(jnp.float32)          # (A*E, A)

    # -- random grand coalitions (plain-JAX glue) -----------------------------
    def _sample_perms(self, key, b_rows):
        # torch.multinomial-without-replacement equivalent: uniform random permutations.
        u = jax.random.uniform(key, (b_rows, self.sample_size, self.n_agents))
        return jnp.argsort(u, axis=-1)

    @staticmethod
    def _coalition_mean(q_f, perms):
        """Coalition-mean q via exclusive prefix sums (replaces the (B,S,A,A) masks)."""
        b_rows, n_samples, n_agents = perms.shape
        q_b = jnp.broadcast_to(q_f[:, None, :], (b_rows, n_samples, n_agents))
        qperm = jnp.take_along_axis(q_b, perms, axis=-1)       # q of agent at position m
        csum_excl = jnp.cumsum(qperm, axis=-1) - qperm         # sum over positions < m
        num = jnp.take_along_axis(csum_excl, perms, axis=-1)   # evaluated at position perm[k]
        den = jnp.maximum(perms.astype(jnp.float32), 1.0)
        return num / den

    @staticmethod
    def _coalition_mean_masks(q_f, perms):
        """Direct transcription of the PyTorch subcoalition/individual mask path
        (sample_grandcoalitions + masked mean).  Validation only."""
        b_rows, n_samples, n_agents = perms.shape
        seq_set = jnp.tril(jnp.ones((n_agents, n_agents), jnp.float32))
        individual = jax.nn.one_hot(perms, n_agents, dtype=jnp.float32)  # 1{j == perm[k]}
        subco = jnp.einsum('bskj,jq->bskq', individual, seq_set)         # 1{q <= perm[k]}
        subco_no_i = subco - individual                                  # 1{q <  perm[k]}
        q_b = jnp.broadcast_to(q_f[:, None, :], (b_rows, n_samples, n_agents))
        q_pos = jnp.take_along_axis(q_b, perms, axis=-1)                 # q[perm[m]]
        num = jnp.sum(subco_no_i * q_pos[:, :, None, :], axis=-1)
        den = jnp.sum(subco_no_i, axis=-1)
        den = jnp.where(den == 0.0, 1.0, den)
        return num / den

    # -- Pallas call ----------------------------------------------------------
    def _pallas_forward(self, states_f, qcq):
        b_rows, state_dim = states_f.shape
        n_agents, embed = self.n_agents, self.embed_dim
        lanes = n_agents * embed
        fused_w = self.w_fused.shape[1]
        qcq_w = qcq.shape[1]
        expand_w = self.expand_mat.shape[1]

        # No host-side padding: Pallas handles the ragged last block (rows are
        # independent; out-of-range output rows are dropped on store).
        tile_b = _TILE_B if b_rows >= _TILE_B else _round_up(b_rows, 8)
        grid_b = pl.cdiv(b_rows, tile_b)

        row2 = lambda i: (i, 0)
        const2 = lambda i: (0, 0)

        # TODO(synk): on v7x try pltpu.CORE_PARALLEL on this axis (needs >= 2 grid steps).
        return pl.pallas_call(
            _shaq_kernel,
            out_shape=jax.ShapeDtypeStruct((b_rows, n_agents), jnp.float32),
            grid=(grid_b,),
            in_specs=[
                pl.BlockSpec((tile_b, state_dim), row2),             # states
                pl.BlockSpec((tile_b, qcq_w), row2),                 # [qc | qi], lane-dense
                pl.BlockSpec((state_dim, fused_w), const2),          # fused hypernet W
                pl.BlockSpec((1, fused_w), const2),                  # fused hypernet b
                pl.BlockSpec((1, embed), const2),                    # hyper_b_2 layer-2 W^T
                pl.BlockSpec((qcq_w, expand_w), const2),             # 0/1 expand matrix
                pl.BlockSpec((lanes, n_agents), const2),             # 0/1 per-agent reduce
                pl.BlockSpec(memory_space=pltpu.MemorySpace.SMEM),   # hyper_b_2 layer-2 bias
            ],
            out_specs=pl.BlockSpec((tile_b, n_agents), row2),
            compiler_params=pltpu.CompilerParams(
                dimension_semantics=("parallel",),
                vmem_limit_bytes=self._vmem_limit),
        )(states_f, qcq, self.w_fused, self.b_fused, self.w_b2b_t,
          self.expand_mat, self.sel_mat, self.b_b2b)

    # -- forward --------------------------------------------------------------
    def forward(self, states, actions, agent_qs, max_filter, target,
                coalition_key, manual_alpha_estimates=None):
        del actions  # unused, as in the reference module
        if target:
            return jnp.sum(agent_qs, axis=2, keepdims=True)
        bs, t, _ = agent_qs.shape
        if manual_alpha_estimates is not None:
            alpha = manual_alpha_estimates * jnp.ones_like(max_filter)
            non_max = 1.0 - max_filter
            return (jnp.sum((alpha * non_max + max_filter) * agent_qs,
                            axis=2, keepdims=True), alpha)
        b_rows = bs * t
        states_f = states.reshape(b_rows, self.state_dim).astype(jnp.float32)
        q_f = agent_qs.reshape(b_rows, self.n_agents).astype(jnp.float32)
        perms = self._sample_perms(coalition_key, b_rows)
        qc = self._coalition_mean(q_f, perms)                              # (B, S, A)
        # Lane-dense kernel input: flattened coalition-means plus the individual q.
        qcq = jnp.concatenate(
            [qc.reshape(b_rows, self.sample_size * self.n_agents), q_f], axis=1)
        alpha = self._pallas_forward(states_f, qcq).reshape(bs, t, self.n_agents)
        # Trivial mixing epilogue kept in plain JAX.
        non_max = 1.0 - max_filter
        q_tot = jnp.sum((alpha * non_max + max_filter) * agent_qs,
                        axis=2, keepdims=True)
        return q_tot, alpha

    # -- pure-JAX reference for validation ------------------------------------
    def reference_forward(self, states, agent_qs, max_filter, coalition_key):
        bs, t, _ = agent_qs.shape
        b_rows = bs * t
        s = states.reshape(b_rows, self.state_dim).astype(jnp.float32)
        q_f = agent_qs.reshape(b_rows, self.n_agents).astype(jnp.float32)
        perms = self._sample_perms(coalition_key, b_rows)
        qc = self._coalition_mean_masks(q_f, perms)   # original mask construction
        w1_c = jnp.abs(s @ self.w_w1c + self.b_w1c)
        w1_i = jnp.abs(s @ self.w_w1i + self.b_w1i)
        b1 = s @ self.w_b1 + self.b_b1
        wf = jnp.abs(s @ self.w_wf + self.b_wf)
        h2 = jnp.maximum(s @ self.w_b2a + self.b_b2a, 0.0)
        b2 = h2 @ self.w_b2b + self.b_b2b
        qi = q_f[:, None, :]
        pre = (qc[..., None] * w1_c[:, None, None, :] +
               qi[..., None] * w1_i[:, None, None, :] +
               b1[:, None, None, :])
        hidden = jnp.where(pre > 0.0, pre, jnp.exp(pre) - 1.0)
        y = jnp.sum(hidden * wf[:, None, None, :], axis=-1) + b2[:, None, :]
        alpha = jnp.mean(jnp.abs(y), axis=1) + 1.0
        mf = max_filter.reshape(-1, self.n_agents).astype(jnp.float32)
        qtot = jnp.sum((alpha * (1.0 - mf) + mf) * q_f, axis=-1, keepdims=True)
        return (qtot.reshape(bs, t, 1), alpha.reshape(bs, t, self.n_agents))


# ---------------------------------------------------------------------------
if __name__ == "__main__":
    n_agents, state_dim, embed_dim, n_actions, sample_size = 4, 32, 32, 6, 8
    bs, t = 2, 8

    key = jax.random.PRNGKey(0)
    k_param, k_state, k_q, k_mf, k_coal = jax.random.split(key, 5)

    mixer = SHAQMixerPallas(n_agents, state_dim, embed_dim, n_actions,
                            sample_size, k_param)

    states = jax.random.normal(k_state, (bs, t, state_dim), jnp.float32)
    agent_qs = jax.random.normal(k_q, (bs, t, n_agents), jnp.float32)
    max_filter = (jax.random.uniform(k_mf, (bs, t, n_agents)) > 0.5).astype(jnp.float32)
    actions = None  # unused by forward

    q_tot, alpha = mixer.forward(states, actions, agent_qs, max_filter,
                                 target=False, coalition_key=k_coal)
    jax.block_until_ready((q_tot, alpha))

    # coalition-mean rewrite vs. the original (subcoalition - individual) mask math
    q_f = agent_qs.reshape(-1, n_agents).astype(jnp.float32)
    perms = mixer._sample_perms(k_coal, bs * t)
    qc_fast = mixer._coalition_mean(q_f, perms)
    qc_mask = mixer._coalition_mean_masks(q_f, perms)
    assert jnp.allclose(qc_fast, qc_mask, atol=1e-5, rtol=1e-5), \
        float(jnp.max(jnp.abs(qc_fast - qc_mask)))

    # target branch (trivial path)
    q_target = mixer.forward(states, actions, agent_qs, max_filter,
                             target=True, coalition_key=k_coal)
    jax.block_until_ready(q_target)

    # validate against the pure-JAX reference with identical coalitions/params
    q_ref, a_ref = mixer.reference_forward(states, agent_qs, max_filter, k_coal)
    assert q_tot.shape == (bs, t, 1) and alpha.shape == (bs, t, n_agents)
    assert jnp.allclose(q_tot, q_ref, atol=1e-3, rtol=1e-3), \
        float(jnp.max(jnp.abs(q_tot - q_ref)))
    assert jnp.allclose(alpha, a_ref, atol=1e-3, rtol=1e-3), \
        float(jnp.max(jnp.abs(alpha - a_ref)))

    # a larger problem exercising the multi-step grid AND the ragged (un-padded) tail
    bs2, t2 = 3, 400
    k_s2, k_q2, k_m2, k_c2 = jax.random.split(jax.random.PRNGKey(1), 4)
    states2 = jax.random.normal(k_s2, (bs2, t2, state_dim), jnp.float32)
    agent_qs2 = jax.random.normal(k_q2, (bs2, t2, n_agents), jnp.float32)
    max_filter2 = (jax.random.uniform(k_m2, (bs2, t2, n_agents)) > 0.5).astype(jnp.float32)
    q_tot2, alpha2 = mixer.forward(states2, None, agent_qs2, max_filter2,
                                   target=False, coalition_key=k_c2)
    jax.block_until_ready((q_tot2, alpha2))
    q_ref2, a_ref2 = mixer.reference_forward(states2, agent_qs2, max_filter2, k_c2)
    assert jnp.allclose(q_tot2, q_ref2, atol=1e-3, rtol=1e-3)
    assert jnp.allclose(alpha2, a_ref2, atol=1e-3, rtol=1e-3)

    print("KERNEL_OK")
</pallas_src>

<mosaic_0001>
module attributes {stable_mosaic.version = 11 : i64} {
  func.func @_shaq_kernel(%arg0: i32, %arg1: memref<16x32xf32, #tpu.memory_space<vmem>>, %arg2: memref<16x36xf32, #tpu.memory_space<vmem>>, %arg3: memref<32x544xf32, #tpu.memory_space<vmem>>, %arg4: memref<1x544xf32, #tpu.memory_space<vmem>>, %arg5: memref<1x32xf32, #tpu.memory_space<vmem>>, %arg6: memref<36x1152xf32, #tpu.memory_space<vmem>>, %arg7: memref<128x4xf32, #tpu.memory_space<vmem>>, %arg8: memref<1x1xf32, #tpu.memory_space<smem>>, %arg9: memref<16x4xf32, #tpu.memory_space<vmem>>) attributes {dimension_semantics = [#tpu.dimension_semantics<parallel>], iteration_bounds = array<i64: 1>, scalar_prefetch = 0 : i64, scratch_operands = 0 : i64, tpu.core_type = #tpu.core_type<tc>, window_params = [{transform_indices = @transform_0, window_bounds = array<i64: 16, 32>}, {transform_indices = @transform_1, window_bounds = array<i64: 16, 36>}, {pipeline_mode = #tpu.pipeline_mode<synchronous>, transform_indices = @transform_2, window_bounds = array<i64: 32, 544>}, {pipeline_mode = #tpu.pipeline_mode<synchronous>, transform_indices = @transform_3, window_bounds = array<i64: 1, 544>}, {pipeline_mode = #tpu.pipeline_mode<synchronous>, transform_indices = @transform_4, window_bounds = array<i64: 1, 32>}, {pipeline_mode = #tpu.pipeline_mode<synchronous>, transform_indices = @transform_5, window_bounds = array<i64: 36, 1152>}, {pipeline_mode = #tpu.pipeline_mode<synchronous>, transform_indices = @transform_6, window_bounds = array<i64: 128, 4>}, {transform_indices = @transform_7, window_bounds = array<i64: 1, 1>}, {transform_indices = @transform_8, window_bounds = array<i64: 16, 4>}]} {
    %c0 = arith.constant 0 : index
    %c0_0 = arith.constant 0 : index
    %0 = vector.load %arg1[%c0, %c0_0] : memref<16x32xf32, #tpu.memory_space<vmem>>, vector<16x32xf32>
    %c0_1 = arith.constant 0 : index
    %c0_2 = arith.constant 0 : index
    %1 = vector.load %arg3[%c0_1, %c0_2] : memref<32x544xf32, #tpu.memory_space<vmem>>, vector<32x544xf32>
    %cst = arith.constant dense<0.000000e+00> : vector<16x544xf32>
    %2 = tpu.matmul %0, %1, %cst {dimension_numbers = #tpu.dot_dimension_numbers<[1], [0], [0], [1], [0, 0, 1, 1], [], []>} : vector<16x32xf32>, vector<32x544xf32>, vector<16x544xf32> -> vector<16x544xf32>
    %c0_3 = arith.constant 0 : index
    %c0_4 = arith.constant 0 : index
    %3 = vector.load %arg4[%c0_3, %c0_4] : memref<1x544xf32, #tpu.memory_space<vmem>>, vector<1x544xf32>
    %4 = vector.broadcast %3 : vector<1x544xf32> to vector<16x544xf32>
    %5 = arith.addf %2, %4 : vector<16x544xf32>
    %6 = vector.extract_strided_slice %5 {offsets = [0, 0], sizes = [16, 128], strides = [1, 1]} : vector<16x544xf32> to vector<16x128xf32>
    %7 = math.absf %6 : vector<16x128xf32>
    %8 = vector.extract_strided_slice %5 {offsets = [0, 128], sizes = [16, 128], strides = [1, 1]} : vector<16x544xf32> to vector<16x128xf32>
    %9 = math.absf %8 : vector<16x128xf32>
    %10 = vector.extract_strided_slice %5 {offsets = [0, 256], sizes = [16, 128], strides = [1, 1]} : vector<16x544xf32> to vector<16x128xf32>
    %11 = vector.extract_strided_slice %5 {offsets = [0, 384], sizes = [16, 128], strides = [1, 1]} : vector<16x544xf32> to vector<16x128xf32>
    %12 = math.absf %11 : vector<16x128xf32>
    %13 = vector.extract_strided_slice %5 {offsets = [0, 512], sizes = [16, 32], strides = [1, 1]} : vector<16x544xf32> to vector<16x32xf32>
    %cst_5 = arith.constant 0.000000e+00 : f32
    %14 = vector.broadcast %cst_5 : f32 to vector<16x32xf32>
    %15 = arith.maximumf %13, %14 : vector<16x32xf32>
    %c0_6 = arith.constant 0 : index
    %c0_7 = arith.constant 0 : index
    %16 = vector.load %arg5[%c0_6, %c0_7] : memref<1x32xf32, #tpu.memory_space<vmem>>, vector<1x32xf32>
    %17 = vector.broadcast %16 : vector<1x32xf32> to vector<16x32xf32>
    %18 = arith.mulf %15, %17 : vector<16x32xf32>
    %cst_8 = arith.constant dense<0.000000e+00> : vector<16xf32>
    %19 = vector.multi_reduction <add>, %18, %cst_8 [1] : vector<16x32xf32> to vector<16xf32>
    %20 = vector.shape_cast %19 : vector<16xf32> to vector<16x1xf32>
    %c0_9 = arith.constant 0 : index
    %c0_10 = arith.constant 0 : index
    %21 = memref.load %arg8[%c0_9, %c0_10] : memref<1x1xf32, #tpu.memory_space<smem>>
    %22 = vector.broadcast %21 : f32 to vector<16x1xf32>
    %23 = arith.addf %20, %22 : vector<16x1xf32>
    %24 = vector.shape_cast %23 : vector<16x1xf32> to vector<16x1xf32>
    %25 = vector.broadcast %24 : vector<16x1xf32> to vector<16x4xf32>
    %c0_11 = arith.constant 0 : index
    %c0_12 = arith.constant 0 : index
    %26 = vector.load %arg2[%c0_11, %c0_12] : memref<16x36xf32, #tpu.memory_space<vmem>>, vector<16x36xf32>
    %c0_13 = arith.constant 0 : index
    %c0_14 = arith.constant 0 : index
    %27 = vector.load %arg6[%c0_13, %c0_14] : memref<36x1152xf32, #tpu.memory_space<vmem>>, vector<36x1152xf32>
    %cst_15 = arith.constant dense<0.000000e+00> : vector<16x1152xf32>
    %28 = tpu.matmul %26, %27, %cst_15 {dimension_numbers = #tpu.dot_dimension_numbers<[1], [0], [0], [1], [0, 0, 1, 1], [], []>} : vector<16x36xf32>, vector<36x1152xf32>, vector<16x1152xf32> -> vector<16x1152xf32>
    %29 = vector.extract_strided_slice %28 {offsets = [0, 1024], sizes = [16, 128], strides = [1, 1]} : vector<16x1152xf32> to vector<16x128xf32>
    %30 = arith.mulf %29, %9 : vector<16x128xf32>
    %31 = arith.addf %30, %10 : vector<16x128xf32>
    %c0_16 = arith.constant 0 : index
    %c0_17 = arith.constant 0 : index
    %32 = vector.load %arg7[%c0_16, %c0_17] : memref<128x4xf32, #tpu.memory_space<vmem>>, vector<128x4xf32>
    %cst_18 = arith.constant 0.000000e+00 : f32
    %33 = vector.broadcast %cst_18 : f32 to vector<16x4xf32>
    %34 = vector.extract_strided_slice %28 {offsets = [0, 0], sizes = [16, 128], strides = [1, 1]} : vector<16x1152xf32> to vector<16x128xf32>
    %35 = arith.mulf %34, %7 : vector<16x128xf32>
    %36 = arith.addf %35, %31 : vector<16x128xf32>
    %cst_19 = arith.constant 0.000000e+00 : f32
    %37 = vector.broadcast %cst_19 : f32 to vector<16x128xf32>
    %38 = arith.cmpf ogt, %36, %37 : vector<16x128xf32>
    %39 = math.exp %36 : vector<16x128xf32>
    %cst_20 = arith.constant 1.000000e+00 : f32
    %40 = vector.broadcast %cst_20 : f32 to vector<16x128xf32>
    %41 = arith.subf %39, %40 : vector<16x128xf32>
    %42 = arith.select %38, %36, %41 : vector<16x128xi1>, vector<16x128xf32>
    %43 = arith.mulf %42, %12 : vector<16x128xf32>
    %cst_21 = arith.constant dense<0.000000e+00> : vector<16x4xf32>
    %44 = tpu.matmul %43, %32, %cst_21 {dimension_numbers = #tpu.dot_dimension_numbers<[1], [0], [0], [1], [0, 0, 1, 1], [], []>} : vector<16x128xf32>, vector<128x4xf32>, vector<16x4xf32> -> vector<16x4xf32>
    %45 = arith.addf %44, %25 : vector<16x4xf32>
    %46 = math.absf %45 : vector<16x4xf32>
    %47 = arith.addf %33, %46 : vector<16x4xf32>
    %48 = vector.extract_strided_slice %28 {offsets = [0, 128], sizes = [16, 128], strides = [1, 1]} : vector<16x1152xf32> to vector<16x128xf32>
    %49 = arith.mulf %48, %7 : vector<16x128xf32>
    %50 = arith.addf %49, %31 : vector<16x128xf32>
    %cst_22 = arith.constant 0.000000e+00 : f32
    %51 = vector.broadcast %cst_22 : f32 to vector<16x128xf32>
    %52 = arith.cmpf ogt, %50, %51 : vector<16x128xf32>
    %53 = math.exp %50 : vector<16x128xf32>
    %cst_23 = arith.constant 1.000000e+00 : f32
    %54 = vector.broadcast %cst_23 : f32 to vector<16x128xf32>
    %55 = arith.subf %53, %54 : vector<16x128xf32>
    %56 = arith.select %52, %50, %55 : vector<16x128xi1>, vector<16x128xf32>
    %57 = arith.mulf %56, %12 : vector<16x128xf32>
    %cst_24 = arith.constant dense<0.000000e+00> : vector<16x4xf32>
    %58 = tpu.matmul %57, %32, %cst_24 {dimension_numbers = #tpu.dot_dimension_numbers<[1], [0], [0], [1], [0, 0, 1, 1], [], []>} : vector<16x128xf32>, vector<128x4xf32>, vector<16x4xf32> -> vector<16x4xf32>
    %59 = arith.addf %58, %25 : vector<16x4xf32>
    %60 = math.absf %59 : vector<16x4xf32>
    %61 = arith.addf %47, %60 : vector<16x4xf32>
    %62 = vector.extract_strided_slice %28 {offsets = [0, 256], sizes = [16, 128], strides = [1, 1]} : vector<16x1152xf32> to vector<16x128xf32>
    %63 = arith.mulf %62, %7 : vector<16x128xf32>
    %64 = arith.addf %63, %31 : vector<16x128xf32>
    %cst_25 = arith.constant 0.000000e+00 : f32
    %65 = vector.broadcast %cst_25 : f32 to vector<16x128xf32>
    %66 = arith.cmpf ogt, %64, %65 : vector<16x128xf32>
    %67 = math.exp %64 : vector<16x128xf32>
    %cst_26 = arith.constant 1.000000e+00 : f32
    %68 = vector.broadcast %cst_26 : f32 to vector<16x128xf32>
    %69 = arith.subf %67, %68 : vector<16x128xf32>
    %70 = arith.select %66, %64, %69 : vector<16x128xi1>, vector<16x128xf32>
    %71 = arith.mulf %70, %12 : vector<16x128xf32>
    %cst_27 = arith.constant dense<0.000000e+00> : vector<16x4xf32>
    %72 = tpu.matmul %71, %32, %cst_27 {dimension_numbers = #tpu.dot_dimension_numbers<[1], [0], [0], [1], [0, 0, 1, 1], [], []>} : vector<16x128xf32>, vector<128x4xf32>, vector<16x4xf32> -> vector<16x4xf32>
    %73 = arith.addf %72, %25 : vector<16x4xf32>
    %74 = math.absf %73 : vector<16x4xf32>
    %75 = arith.addf %61, %74 : vector<16x4xf32>
    %76 = vector.extract_strided_slice %28 {offsets = [0, 384], sizes = [16, 128], strides = [1, 1]} : vector<16x1152xf32> to vector<16x128xf32>
    %77 = arith.mulf %76, %7 : vector<16x128xf32>
    %78 = arith.addf %77, %31 : vector<16x128xf32>
    %cst_28 = arith.constant 0.000000e+00 : f32
    %79 = vector.broadcast %cst_28 : f32 to vector<16x128xf32>
    %80 = arith.cmpf ogt, %78, %79 : vector<16x128xf32>
    %81 = math.exp %78 : vector<16x128xf32>
    %cst_29 = arith.constant 1.000000e+00 : f32
    %82 = vector.broadcast %cst_29 : f32 to vector<16x128xf32>
    %83 = arith.subf %81, %82 : vector<16x128xf32>
    %84 = arith.select %80, %78, %83 : vector<16x128xi1>, vector<16x128xf32>
    %85 = arith.mulf %84, %12 : vector<16x128xf32>
    %cst_30 = arith.constant dense<0.000000e+00> : vector<16x4xf32>
    %86 = tpu.matmul %85, %32, %cst_30 {dimension_numbers = #tpu.dot_dimension_numbers<[1], [0], [0], [1], [0, 0, 1, 1], [], []>} : vector<16x128xf32>, vector<128x4xf32>, vector<16x4xf32> -> vector<16x4xf32>
    %87 = arith.addf %86, %25 : vector<16x4xf32>
    %88 = math.absf %87 : vector<16x4xf32>
    %89 = arith.addf %75, %88 : vector<16x4xf32>
    %90 = vector.extract_strided_slice %28 {offsets = [0, 512], sizes = [16, 128], strides = [1, 1]} : vector<16x1152xf32> to vector<16x128xf32>
    %91 = arith.mulf %90, %7 : vector<16x128xf32>
    %92 = arith.addf %91, %31 : vector<16x128xf32>
    %cst_31 = arith.constant 0.000000e+00 : f32
    %93 = vector.broadcast %cst_31 : f32 to vector<16x128xf32>
    %94 = arith.cmpf ogt, %92, %93 : vector<16x128xf32>
    %95 = math.exp %92 : vector<16x128xf32>
    %cst_32 = arith.constant 1.000000e+00 : f32
    %96 = vector.broadcast %cst_32 : f32 to vector<16x128xf32>
    %97 = arith.subf %95, %96 : vector<16x128xf32>
    %98 = arith.select %94, %92, %97 : vector<16x128xi1>, vector<16x128xf32>
    %99 = arith.mulf %98, %12 : vector<16x128xf32>
    %cst_33 = arith.constant dense<0.000000e+00> : vector<16x4xf32>
    %100 = tpu.matmul %99, %32, %cst_33 {dimension_numbers = #tpu.dot_dimension_numbers<[1], [0], [0], [1], [0, 0, 1, 1], [], []>} : vector<16x128xf32>, vector<128x4xf32>, vector<16x4xf32> -> vector<16x4xf32>
    %101 = arith.addf %100, %25 : vector<16x4xf32>
    %102 = math.absf %101 : vector<16x4xf32>
    %103 = arith.addf %89, %102 : vector<16x4xf32>
    %104 = vector.extract_strided_slice %28 {offsets = [0, 640], sizes = [16, 128], strides = [1, 1]} : vector<16x1152xf32> to vector<16x128xf32>
    %105 = arith.mulf %104, %7 : vector<16x128xf32>
    %106 = arith.addf %105, %31 : vector<16x128xf32>
    %cst_34 = arith.constant 0.000000e+00 : f32
    %107 = vector.broadcast %cst_34 : f32 to vector<16x128xf32>
    %108 = arith.cmpf ogt, %106, %107 : vector<16x128xf32>
    %109 = math.exp %106 : vector<16x128xf32>
    %cst_35 = arith.constant 1.000000e+00 : f32
    %110 = vector.broadcast %cst_35 : f32 to vector<16x128xf32>
    %111 = arith.subf %109, %110 : vector<16x128xf32>
    %112 = arith.select %108, %106, %111 : vector<16x128xi1>, vector<16x128xf32>
    %113 = arith.mulf %112, %12 : vector<16x128xf32>
    %cst_36 = arith.constant dense<0.000000e+00> : vector<16x4xf32>
    %114 = tpu.matmul %113, %32, %cst_36 {dimension_numbers = #tpu.dot_dimension_numbers<[1], [0], [0], [1], [0, 0, 1, 1], [], []>} : vector<16x128xf32>, vector<128x4xf32>, vector<16x4xf32> -> vector<16x4xf32>
    %115 = arith.addf %114, %25 : vector<16x4xf32>
    %116 = math.absf %115 : vector<16x4xf32>
    %117 = arith.addf %103, %116 : vector<16x4xf32>
    %118 = vector.extract_strided_slice %28 {offsets = [0, 768], sizes = [16, 128], strides = [1, 1]} : vector<16x1152xf32> to vector<16x128xf32>
    %119 = arith.mulf %118, %7 : vector<16x128xf32>
    %120 = arith.addf %119, %31 : vector<16x128xf32>
    %cst_37 = arith.constant 0.000000e+00 : f32
    %121 = vector.broadcast %cst_37 : f32 to vector<16x128xf32>
    %122 = arith.cmpf ogt, %120, %121 : vector<16x128xf32>
    %123 = math.exp %120 : vector<16x128xf32>
    %cst_38 = arith.constant 1.000000e+00 : f32
    %124 = vector.broadcast %cst_38 : f32 to vector<16x128xf32>
    %125 = arith.subf %123, %124 : vector<16x128xf32>
    %126 = arith.select %122, %120, %125 : vector<16x128xi1>, vector<16x128xf32>
    %127 = arith.mulf %126, %12 : vector<16x128xf32>
    %cst_39 = arith.constant dense<0.000000e+00> : vector<16x4xf32>
    %128 = tpu.matmul %127, %32, %cst_39 {dimension_numbers = #tpu.dot_dimension_numbers<[1], [0], [0], [1], [0, 0, 1, 1], [], []>} : vector<16x128xf32>, vector<128x4xf32>, vector<16x4xf32> -> vector<16x4xf32>
    %129 = arith.addf %128, %25 : vector<16x4xf32>
    %130 = math.absf %129 : vector<16x4xf32>
    %131 = arith.addf %117, %130 : vector<16x4xf32>
    %132 = vector.extract_strided_slice %28 {offsets = [0, 896], sizes = [16, 128], strides = [1, 1]} : vector<16x1152xf32> to vector<16x128xf32>
    %133 = arith.mulf %132, %7 : vector<16x128xf32>
    %134 = arith.addf %133, %31 : vector<16x128xf32>
    %cst_40 = arith.constant 0.000000e+00 : f32
    %135 = vector.broadcast %cst_40 : f32 to vector<16x128xf32>
    %136 = arith.cmpf ogt, %134, %135 : vector<16x128xf32>
    %137 = math.exp %134 : vector<16x128xf32>
    %cst_41 = arith.constant 1.000000e+00 : f32
    %138 = vector.broadcast %cst_41 : f32 to vector<16x128xf32>
    %139 = arith.subf %137, %138 : vector<16x128xf32>
    %140 = arith.select %136, %134, %139 : vector<16x128xi1>, vector<16x128xf32>
    %141 = arith.mulf %140, %12 : vector<16x128xf32>
    %cst_42 = arith.constant dense<0.000000e+00> : vector<16x4xf32>
    %142 = tpu.matmul %141, %32, %cst_42 {dimension_numbers = #tpu.dot_dimension_numbers<[1], [0], [0], [1], [0, 0, 1, 1], [], []>} : vector<16x128xf32>, vector<128x4xf32>, vector<16x4xf32> -> vector<16x4xf32>
    %143 = arith.addf %142, %25 : vector<16x4xf32>
    %144 = math.absf %143 : vector<16x4xf32>
    %145 = arith.addf %131, %144 : vector<16x4xf32>
    %cst_43 = arith.constant 1.250000e-01 : f32
    %146 = vector.broadcast %cst_43 : f32 to vector<16x4xf32>
    %147 = arith.mulf %145, %146 : vector<16x4xf32>
    %cst_44 = arith.constant 1.000000e+00 : f32
    %148 = vector.broadcast %cst_44 : f32 to vector<16x4xf32>
    %149 = arith.addf %147, %148 : vector<16x4xf32>
    %c0_45 = arith.constant 0 : index
    %c0_46 = arith.constant 0 : index
    %150 = vector.load %arg9[%c0_45, %c0_46] : memref<16x4xf32, #tpu.memory_space<vmem>>, vector<16x4xf32>
    tpu.vector_store %arg9[%c0_45, %c0_46], %149 {strides = array<i32>} : memref<16x4xf32, #tpu.memory_space<vmem>>, vector<16x4xf32>,
    return
  }
  func.func @transform_0(%arg0: i32) -> (i32, i32) {
    %c0_i32 = arith.constant 0 : i32
    %c0_i32_0 = arith.constant 0 : i32
    return %arg0, %c0_i32 : i32, i32
  }
  func.func @transform_1(%arg0: i32) -> (i32, i32) {
    %c0_i32 = arith.constant 0 : i32
    %c0_i32_0 = arith.constant 0 : i32
    return %arg0, %c0_i32 : i32, i32
  }
  func.func @transform_2(%arg0: i32) -> (i32, i32) {
    %c0_i32 = arith.constant 0 : i32
    %c0_i32_0 = arith.constant 0 : i32
    %c0_i32_1 = arith.constant 0 : i32
    return %c0_i32, %c0_i32_0 : i32, i32
  }
  func.func @transform_3(%arg0: i32) -> (i32, i32) {
    %c0_i32 = arith.constant 0 : i32
    %c0_i32_0 = arith.constant 0 : i32
    %c0_i32_1 = arith.constant 0 : i32
    return %c0_i32, %c0_i32_0 : i32, i32
  }
  func.func @transform_4(%arg0: i32) -> (i32, i32) {
    %c0_i32 = arith.constant 0 : i32
    %c0_i32_0 = arith.constant 0 : i32
    %c0_i32_1 = arith.constant 0 : i32
    return %c0_i32, %c0_i32_0 : i32, i32
  }
  func.func @transform_5(%arg0: i32) -> (i32, i32) {
    %c0_i32 = arith.constant 0 : i32
    %c0_i32_0 = arith.constant 0 : i32
    %c0_i32_1 = arith.constant 0 : i32
    return %c0_i32, %c0_i32_0 : i32, i32
  }
  func.func @transform_6(%arg0: i32) -> (i32, i32) {
    %c0_i32 = arith.constant 0 : i32
    %c0_i32_0 = arith.constant 0 : i32
    %c0_i32_1 = arith.constant 0 : i32
    return %c0_i32, %c0_i32_0 : i32, i32
  }
  func.func @transform_7(%arg0: i32) -> (i32, i32) {
    %c0_i32 = arith.constant 0 : i32
    %c0_i32_0 = arith.constant 0 : i32
    %c0_i32_1 = arith.constant 0 : i32
    return %c0_i32, %c0_i32_0 : i32, i32
  }
  func.func @transform_8(%arg0: i32) -> (i32, i32) {
    %c0_i32 = arith.constant 0 : i32
    %c0_i32_0 = arith.constant 0 : i32
    return %arg0, %c0_i32 : i32, i32
  }
}

</mosaic_0001>

<llo_original>
// kernel: tpu_custom_call.1
$region0: #{tpu_custom_call.1}
  #allocation0 [shape = 'u32[]', space=smem, size = 0x4, offset = 0x4, fixed_abs, tag = 'smem constant byte address 0x4 - core index']
  #allocation1 [shape = 'u32[144,128]{1,0:T(1,128)}', space=vmem, size = 0x12000, scoped, tag = 'internal scratch']
  #allocation2 [shape = 'f32[1,1]{1,0:T(1,128)S(6)}', space=smem, size = 0x200, scoped, tag = 'scoped memory for tpu_custom_call.1']
  %s0 = inlined_call_operand.vmem [shape: f32[16,32], index: 0, kind: input, shape index: {}]
  %s1 = inlined_call_operand.vmem [shape: f32[16,36], index: 1, kind: input, shape index: {}]
  %s2 = inlined_call_operand.hbm [shape: f32[32,544], index: 2, kind: input, shape index: {}]
  %s3 = inlined_call_operand.vmem [shape: f32[1,544], index: 3, kind: input, shape index: {}]
  %s4 = inlined_call_operand.vmem [shape: f32[1,32], index: 4, kind: input, shape index: {}]
  %s5 = inlined_call_operand.hbm [shape: f32[36,1152], index: 5, kind: input, shape index: {}]
  %s6 = inlined_call_operand.vmem [shape: f32[128,4], index: 6, kind: input, shape index: {}]
  %s7 = inlined_call_operand.<no memory space> [shape: f32[1,1], index: 7, kind: input, shape index: {}]
  %s8 = inlined_call_operand.vmem [shape: f32[16,4], index: 8, kind: output, shape index: {}]
  %s9 = sld [smem:[#allocation0]]
  $region50: #{tpu_custom_call.1} parent=0
    _
  %s11 = ssub.s32 1, %s9
  %s12 = scalar_select 0, %s11, %s9
  %13 = sst [smem:[#allocation2]] %s7
  $region1: #{tpu_custom_call.1} parent=0
    #allocation3 [shape = 'u8[81920]{0}', space=vmem, size = 0x14000, scoped, tag = 'input window, operand 2, single buffered']
    #allocation4 [shape = 's32[1]{0}', space=sflag, size = 0x4, scoped, tag = 'scoped memory for tpu_custom_call.1']
    #allocation5 [shape = 'u8[184320]{0}', space=vmem, size = 0x2d000, scoped, tag = 'input window, operand 5, single buffered']
    #allocation6 [shape = 's32[1]{0}', space=sflag, size = 0x4, scoped, tag = 'scoped memory for tpu_custom_call.1']
    %14 = vsyncpa [#allocation4], 0
    %15 = vsyncpa [#allocation6], 0
    // Predicated region
    $region2: #{tpu_custom_call.1} parent=1 // pred_check
      _
    $region3: #{tpu_custom_call.1} parent=1 // pred_check_branch
      %17 = sbr.rel (0) target = $region5
    $region4: #{tpu_custom_call.1} parent=1 // pred_region
      _
    $region5: #{tpu_custom_call.1} parent=1 // pred_fallthru
      _
    // Predicated region
    $region6: #{tpu_custom_call.1} parent=1 // pred_check
      _
    $region7: #{tpu_custom_call.1} parent=1 // pred_check_branch
      %19 = sbr.rel (0) target = $region9
    $region8: #{tpu_custom_call.1} parent=1 // pred_region
      _
    $region9: #{tpu_custom_call.1} parent=1 // pred_fallthru
      _
    // Predicated region
    $region10: #{tpu_custom_call.1} parent=1 // pred_check
      _
    $region11: #{tpu_custom_call.1} parent=1 // pred_check_branch
      %21 = sbr.rel (0) target = $region13
    $region12: #{tpu_custom_call.1} parent=1 // pred_region
      %s23 = ssub.s32 2560, 2560
      %24 = vsyncadd [#allocation4], %s23
      %s25 = sshll.u32 [#allocation3], 4
      %s26 = int_to_ptr.vmem [resolvable:$true] %s25
      %31 = dma.hbm_to_vmem [thread:$0]  %s2, 2560, %s26, [#allocation4], 640, 640, 40
    $region13: #{tpu_custom_call.1} parent=1 // pred_fallthru
      _
    // Predicated region
    $region14: #{tpu_custom_call.1} parent=1 // pred_check
      _
    $region15: #{tpu_custom_call.1} parent=1 // pred_check_branch
      %33 = sbr.rel (0) target = $region17
    $region16: #{tpu_custom_call.1} parent=1 // pred_region
      _
    $region17: #{tpu_custom_call.1} parent=1 // pred_fallthru
      _
    // Predicated region
    $region18: #{tpu_custom_call.1} parent=1 // pred_check
      _
    $region19: #{tpu_custom_call.1} parent=1 // pred_check_branch
      %35 = sbr.rel (0) target = $region21
    $region20: #{tpu_custom_call.1} parent=1 // pred_region
      _
    $region21: #{tpu_custom_call.1} parent=1 // pred_fallthru
      _
    // Predicated region
    $region22: #{tpu_custom_call.1} parent=1 // pred_check
      _
    $region23: #{tpu_custom_call.1} parent=1 // pred_check_branch
      %37 = sbr.rel (0) target = $region25
    $region24: #{tpu_custom_call.1} parent=1 // pred_region
      %s39 = ssub.s32 5760, 5760
      %40 = vsyncadd [#allocation6], %s39
      %s41 = sshll.u32 [#allocation5], 4
      %s42 = int_to_ptr.vmem [resolvable:$true] %s41
      %47 = dma.hbm_to_vmem [thread:$0]  %s5, 5760, %s42, [#allocation6], 1152, 1152, 72
    $region25: #{tpu_custom_call.1} parent=1 // pred_fallthru
      _
    // Predicated region
    $region26: #{tpu_custom_call.1} parent=1 // pred_check
      _
    $region27: #{tpu_custom_call.1} parent=1 // pred_check_branch
      %49 = sbr.rel (0) target = $region29
    $region28: #{tpu_custom_call.1} parent=1 // pred_region
      _
    $region29: #{tpu_custom_call.1} parent=1 // pred_fallthru
      _
    // Predicated region
    $region30: #{tpu_custom_call.1} parent=1 // pred_check
      _
    $region31: #{tpu_custom_call.1} parent=1 // pred_check_branch
      %51 = sbr.rel (0) target = $region33
    $region32: #{tpu_custom_call.1} parent=1 // pred_region
      _
    $region33: #{tpu_custom_call.1} parent=1 // pred_fallthru
      _
    // Predicated region
    $region34: #{tpu_custom_call.1} parent=1 // pred_check
      _
    $region35: #{tpu_custom_call.1} parent=1 // pred_check_branch
      %53 = sbr.rel (0) target = $region37
    $region36: #{tpu_custom_call.1} parent=1 // pred_region
      %54 = dma.done [#allocation4], 2560
    $region37: #{tpu_custom_call.1} parent=1 // pred_fallthru
      _
    // Predicated region
    $region38: #{tpu_custom_call.1} parent=1 // pred_check
      _
    $region39: #{tpu_custom_call.1} parent=1 // pred_check_branch
      %56 = sbr.rel (0) target = $region41
    $region40: #{tpu_custom_call.1} parent=1 // pred_region
      %57 = dma.done [#allocation6], 5760
    $region41: #{tpu_custom_call.1} parent=1 // pred_fallthru
      _
    %v58 = vld [vmem:[%s0] sm:$0xff]
    %v59 = vld [vmem:[%s0 + $0x8] sm:$0xff]
    %v60 = vld [vmem:[#allocation3] sm:$0xff]
    %v61 = vld [vmem:[#allocation3 + $0x8] sm:$0xff]
    %v62 = vld [vmem:[#allocation3 + $0x10] sm:$0xff]
    %v63 = vld [vmem:[#allocation3 + $0x18] sm:$0xff]
    %v64 = vld [vmem:[#allocation3 + $0x20] sm:$0xff]
    %v65 = vld [vmem:[#allocation3 + $0x28] sm:$0xff]
    %v66 = vld [vmem:[#allocation3 + $0x30] sm:$0xff]
    %v67 = vld [vmem:[#allocation3 + $0x38] sm:$0xff]
    %v68 = vld [vmem:[#allocation3 + $0x40] sm:$0xff]
    %v69 = vld [vmem:[#allocation3 + $0x48] sm:$0xff]
    %v70 = vld [vmem:[#allocation3 + $0x50] sm:$0xff]
    %v71 = vld [vmem:[#allocation3 + $0x58] sm:$0xff]
    %v72 = vld [vmem:[#allocation3 + $0x60] sm:$0xff]
    %v73 = vld [vmem:[#allocation3 + $0x68] sm:$0xff]
    %v74 = vld [vmem:[#allocation3 + $0x70] sm:$0xff]
    %v75 = vld [vmem:[#allocation3 + $0x78] sm:$0xff]
    %v76 = vld [vmem:[#allocation3 + $0x80] sm:$0xff]
    %v77 = vld [vmem:[#allocation3 + $0x88] sm:$0xff]
    %v78 = vld [vmem:[#allocation3 + $0x90] sm:$0xff]
    %v79 = vld [vmem:[#allocation3 + $0x98] sm:$0xff]
    %v80 = vld [vmem:[%s3] sm:$0x1f]
    %v82 = vlaneseq
    %v83 = vshrl.u32 %v82, 7
    %v84 = vsub.s32 0, %v83
    %v85 = vrot.slane %v80, %v84
    %v86 = vlaneseq
    %v87 = vshrl.u32 %v86, 7
    %v88 = vsub.s32 1, %v87
    %v89 = vrot.slane %v80, %v88
    %v90 = vlaneseq
    %v91 = vshrl.u32 %v90, 7
    %v92 = vsub.s32 2, %v91
    %v93 = vrot.slane %v80, %v92
    %v94 = vlaneseq
    %v95 = vshrl.u32 %v94, 7
    %v96 = vsub.s32 3, %v95
    %v97 = vrot.slane %v80, %v96
    %v98 = vlaneseq
    %v99 = vshrl.u32 %v98, 7
    %v100 = vsub.s32 4, %v99
    %v101 = vrot.slane %v80, %v100
    %vm107 = vcmask 261120
    %v109 = vsel %vm107, %v58, 0
    %v112 = vsel %vm107, %v59, 0
    %114 = vmatprep.subr.mxu0 %v61
    %115 = vmatpush1.msra.mxu0 %v60
    %116 = vmatprep.subr.mxu0 %v66
    %117 = vmatpush1.msra.mxu0 %v65
    %118 = vmatprep.subr.mxu0 %v71
    %119 = vmatpush1.msra.mxu0 %v70
    %120 = vmatprep.subr.mxu0 %v76
    %121 = vmatpush1.msra.mxu0 %v75
    %122 = vmatprep.subr.mxu0 0.0
    %123 = vmatpush1.msra.mxu0 0.0
    %124 = vmatprep.subr.mxu0 0.0
    %125 = vmatpush1.msra.mxu0 0.0
    %126 = vmatprep.subr.mxu0 0.0
    %127 = vmatpush1.msra.mxu0 0.0
    %128 = vmatprep.subr.mxu0 0.0
    %129 = vmatpush1.msra.mxu0 0.0
    %130 = vmatprep.subr.mxu0 0.0
    %131 = vmatpush1.msra.mxu0 0.0
    %132 = vmatprep.subr.mxu0 0.0
    %133 = vmatpush1.msra.mxu0 0.0
    %134 = vmatprep.subr.mxu0 0.0
    %135 = vmatpush1.msra.mxu0 0.0
    %136 = vmatprep.subr.mxu0 0.0
    %137 = vmatpush1.msra.mxu0 0.0
    %138 = vmatprep.subr.mxu0 0.0
    %139 = vmatpush1.msra.mxu0 0.0
    %140 = vmatprep.subr.mxu0 0.0
    %141 = vmatpush1.msra.mxu0 0.0
    %142 = vmatprep.subr.mxu0 0.0
    %143 = vmatpush1.msra.mxu0 0.0
    %144 = vmatprep.subr.mxu0 0.0
    %145 = vmatpush1.msra.mxu0 0.0
    %146 = vmatprep.subr.mxu0 0.0
    %147 = vmatpush1.msra.mxu0 0.0
    %148 = vmatprep.subr.mxu0 0.0
    %149 = vmatpush1.msra.mxu0 0.0
    %150 = vmatprep.subr.mxu0 0.0
    %151 = vmatpush1.msra.mxu0 0.0
    %152 = vmatprep.subr.mxu0 0.0
    %153 = vmatpush1.msra.mxu0 0.0
    %154 = vmatprep.subr.mxu0 0.0
    %155 = vmatpush1.msra.mxu0 0.0
    %156 = vmatprep.subr.mxu0 0.0
    %157 = vmatpush1.msra.mxu0 0.0
    %158 = vmatprep.subr.mxu0 0.0
    %159 = vmatpush1.msra.mxu0 0.0
    %160 = vmatprep.subr.mxu0 0.0
    %161 = vmatpush1.msra.mxu0 0.0
    %162 = vmatprep.subr.mxu0 0.0
    %163 = vmatpush1.msra.mxu0 0.0
    %164 = vmatprep.subr.mxu0 0.0
    %165 = vmatpush1.msra.mxu0 0.0
    %166 = vmatprep.subr.mxu0 0.0
    %167 = vmatpush1.msra.mxu0 0.0
    %168 = vmatprep.subr.mxu0 0.0
    %169 = vmatpush1.msra.mxu0 0.0
    %170 = vmatprep.subr.mxu0 0.0
    %171 = vmatpush1.msra.mxu0 0.0
    %172 = vmatprep.subr.mxu0 0.0
    %173 = vmatpush1.msra.mxu0 0.0
    %174 = vmatprep.subr.mxu0 0.0
    %175 = vmatpush1.msra.mxu0 0.0
    %176 = vmatprep.subr.mxu0 0.0
    %177 = vmatpush1.msra.mxu0 0.0
    %178 = vmatprep.mubr.f32.mxu0 0.0
    %179 = vmatmul.mubr.f32.gmra.mrb[0].mxu0 %v109
    %v180 = vpop.f32.mrb[0].mxu0
    %v181 = vadd.f32 %v85, %v180
    %v182 = vpop.f32.mrb[0].mxu0
    %v183 = vadd.f32 %v89, %v182
    %184 = vmatprep.mubr.f32.mxu0 0.0
    %185 = vmatmul.mubr.f32.gmra.mrb[0].mxu0 %v112
    %v186 = vpop.f32.mrb[0].mxu0
    %v187 = vadd.f32 %v85, %v186
    %v188 = vpop.f32.mrb[0].mxu0
    %v189 = vadd.f32 %v89, %v188
    %190 = vdwg.mxu0
    %191 = vmatprep.subr.mxu0 %v63
    %192 = vmatpush1.msra.mxu0 %v62
    %193 = vmatprep.subr.mxu0 %v68
    %194 = vmatpush1.msra.mxu0 %v67
    %195 = vmatprep.subr.mxu0 %v73
    %196 = vmatpush1.msra.mxu0 %v72
    %197 = vmatprep.subr.mxu0 %v78
    %198 = vmatpush1.msra.mxu0 %v77
    %199 = vmatprep.subr.mxu0 0.0
    %200 = vmatpush1.msra.mxu0 0.0
    %201 = vmatprep.subr.mxu0 0.0
    %202 = vmatpush1.msra.mxu0 0.0
    %203 = vmatprep.subr.mxu0 0.0
    %204 = vmatpush1.msra.mxu0 0.0
    %205 = vmatprep.subr.mxu0 0.0
    %206 = vmatpush1.msra.mxu0 0.0
    %207 = vmatprep.subr.mxu0 0.0
    %208 = vmatpush1.msra.mxu0 0.0
    %209 = vmatprep.subr.mxu0 0.0
    %210 = vmatpush1.msra.mxu0 0.0
    %211 = vmatprep.subr.mxu0 0.0
    %212 = vmatpush1.msra.mxu0 0.0
    %213 = vmatprep.subr.mxu0 0.0
    %214 = vmatpush1.msra.mxu0 0.0
    %215 = vmatprep.subr.mxu0 0.0
    %216 = vmatpush1.msra.mxu0 0.0
    %217 = vmatprep.subr.mxu0 0.0
    %218 = vmatpush1.msra.mxu0 0.0
    %219 = vmatprep.subr.mxu0 0.0
    %220 = vmatpush1.msra.mxu0 0.0
    %221 = vmatprep.subr.mxu0 0.0
    %222 = vmatpush1.msra.mxu0 0.0
    %223 = vmatprep.subr.mxu0 0.0
    %224 = vmatpush1.msra.mxu0 0.0
    %225 = vmatprep.subr.mxu0 0.0
    %226 = vmatpush1.msra.mxu0 0.0
    %227 = vmatprep.subr.mxu0 0.0
    %228 = vmatpush1.msra.mxu0 0.0
    %229 = vmatprep.subr.mxu0 0.0
    %230 = vmatpush1.msra.mxu0 0.0
    %231 = vmatprep.subr.mxu0 0.0
    %232 = vmatpush1.msra.mxu0 0.0
    %233 = vmatprep.subr.mxu0 0.0
    %234 = vmatpush1.msra.mxu0 0.0
    %235 = vmatprep.subr.mxu0 0.0
    %236 = vmatpush1.msra.mxu0 0.0
    %237 = vmatprep.subr.mxu0 0.0
    %238 = vmatpush1.msra.mxu0 0.0
    %239 = vmatprep.subr.mxu0 0.0
    %240 = vmatpush1.msra.mxu0 0.0
    %241 = vmatprep.subr.mxu0 0.0
    %242 = vmatpush1.msra.mxu0 0.0
    %243 = vmatprep.subr.mxu0 0.0
    %244 = vmatpush1.msra.mxu0 0.0
    %245 = vmatprep.subr.mxu0 0.0
    %246 = vmatpush1.msra.mxu0 0.0
    %247 = vmatprep.subr.mxu0 0.0
    %248 = vmatpush1.msra.mxu0 0.0
    %249 = vmatprep.subr.mxu0 0.0
    %250 = vmatpush1.msra.mxu0 0.0
    %251 = vmatprep.subr.mxu0 0.0
    %252 = vmatpush1.msra.mxu0 0.0
    %253 = vmatprep.subr.mxu0 0.0
    %254 = vmatpush1.msra.mxu0 0.0
    %255 = vmatprep.mubr.f32.mxu0 0.0
    %256 = vmatmul.mubr.f32.gmra.mrb[0].mxu0 %v109
    %v257 = vpop.f32.mrb[0].mxu0
    %v258 = vadd.f32 %v93, %v257
    %v259 = vpop.f32.mrb[0].mxu0
    %v260 = vadd.f32 %v97, %v259
    %261 = vmatprep.mubr.f32.mxu0 0.0
    %262 = vmatmul.mubr.f32.gmra.mrb[0].mxu0 %v112
    %v263 = vpop.f32.mrb[0].mxu0
    %v264 = vadd.f32 %v93, %v263
    %v265 = vpop.f32.mrb[0].mxu0
    %v266 = vadd.f32 %v97, %v265
    %267 = vdwg.mxu0
    %268 = vmatprep.subr.mxu0 0.0
    %269 = vmatpush1.msra.mxu0 %v64
    %270 = vmatprep.subr.mxu0 0.0
    %271 = vmatpush1.msra.mxu0 %v69
    %272 = vmatprep.subr.mxu0 0.0
    %273 = vmatpush1.msra.mxu0 %v74
    %274 = vmatprep.subr.mxu0 0.0
    %275 = vmatpush1.msra.mxu0 %v79
    %276 = vmatprep.subr.mxu0 0.0
    %277 = vmatpush1.msra.mxu0 0.0
    %278 = vmatprep.subr.mxu0 0.0
    %279 = vmatpush1.msra.mxu0 0.0
    %280 = vmatprep.subr.mxu0 0.0
    %281 = vmatpush1.msra.mxu0 0.0
    %282 = vmatprep.subr.mxu0 0.0
    %283 = vmatpush1.msra.mxu0 0.0
    %284 = vmatprep.subr.mxu0 0.0
    %285 = vmatpush1.msra.mxu0 0.0
    %286 = vmatprep.subr.mxu0 0.0
    %287 = vmatpush1.msra.mxu0 0.0
    %288 = vmatprep.subr.mxu0 0.0
    %289 = vmatpush1.msra.mxu0 0.0
    %290 = vmatprep.subr.mxu0 0.0
    %291 = vmatpush1.msra.mxu0 0.0
    %292 = vmatprep.subr.mxu0 0.0
    %293 = vmatpush1.msra.mxu0 0.0
    %294 = vmatprep.subr.mxu0 0.0
    %295 = vmatpush1.msra.mxu0 0.0
    %296 = vmatprep.subr.mxu0 0.0
    %297 = vmatpush1.msra.mxu0 0.0
    %298 = vmatprep.subr.mxu0 0.0
    %299 = vmatpush1.msra.mxu0 0.0
    %300 = vmatprep.subr.mxu0 0.0
    %301 = vmatpush1.msra.mxu0 0.0
    %302 = vmatprep.subr.mxu0 0.0
    %303 = vmatpush1.msra.mxu0 0.0
    %304 = vmatprep.subr.mxu0 0.0
    %305 = vmatpush1.msra.mxu0 0.0
    %306 = vmatprep.subr.mxu0 0.0
    %307 = vmatpush1.msra.mxu0 0.0
    %308 = vmatprep.subr.mxu0 0.0
    %309 = vmatpush1.msra.mxu0 0.0
    %310 = vmatprep.subr.mxu0 0.0
    %311 = vmatpush1.msra.mxu0 0.0
    %312 = vmatprep.subr.mxu0 0.0
    %313 = vmatpush1.msra.mxu0 0.0
    %314 = vmatprep.subr.mxu0 0.0
    %315 = vmatpush1.msra.mxu0 0.0
    %316 = vmatprep.subr.mxu0 0.0
    %317 = vmatpush1.msra.mxu0 0.0
    %318 = vmatprep.subr.mxu0 0.0
    %319 = vmatpush1.msra.mxu0 0.0
    %320 = vmatprep.subr.mxu0 0.0
    %321 = vmatpush1.msra.mxu0 0.0
    %322 = vmatprep.subr.mxu0 0.0
    %323 = vmatpush1.msra.mxu0 0.0
    %324 = vmatprep.subr.mxu0 0.0
    %325 = vmatpush1.msra.mxu0 0.0
    %326 = vmatprep.subr.mxu0 0.0
    %327 = vmatpush1.msra.mxu0 0.0
    %328 = vmatprep.subr.mxu0 0.0
    %329 = vmatpush1.msra.mxu0 0.0
    %330 = vmatprep.subr.mxu0 0.0
    %331 = vmatpush1.msra.mxu0 0.0
    %332 = vmatprep.mubr.f32.mxu0 0.0
    %333 = vmatmul.mubr.f32.gmra.mrb[0].mxu0 %v109
    %v334 = vpop.f32.mrb[0].mxu0
    %v335 = vadd.f32 %v101, %v334
    %v336 = vpop.f32.mrb[0].mxu0
    %337 = vmatprep.mubr.f32.mxu0 0.0
    %338 = vmatmul.mubr.f32.gmra.mrb[0].mxu0 %v112
    %v339 = vpop.f32.mrb[0].mxu0
    %v340 = vadd.f32 %v101, %v339
    %v341 = vpop.f32.mrb[0].mxu0
    %342 = vdwg.mxu0
    %v343 = vand.u32 2147483647, %v181
    %v344 = vand.u32 2147483647, %v187
    %v345 = vand.u32 2147483647, %v183
    %v346 = vand.u32 2147483647, %v189
    %v347 = vand.u32 2147483647, %v260
    %v348 = vand.u32 2147483647, %v266
    %v349 = vmax.f32 %v335, 0.0
    %v350 = vmax.f32 %v340, 0.0
    %v351 = vld [vmem:[%s4] sm:$0x1]
    %v353 = vlaneseq
    %v354 = vshrl.u32 %v353, 7
    %v355 = vsub.s32 0, %v354
    %v356 = vrot.slane %v351, %v355
    %v358 = vmul.f32 %v349, %v356
    %v359 = vmul.f32 %v350, %v356
    %v360 = vsel %vm107, %v358, 0.0
    %361 = vadd.xlane.f32.xlu0 %v360
    %v362 = vpop.xlane.xlu0 %361
    %v363 = vsel %vm107, %v359, 0.0
    %364 = vadd.xlane.f32.xlu0 %v363
    %v365 = vpop.xlane.xlu0 %364
    %s366 = sld [smem:[#allocation2]]
    %v367 = vstv %s366
    %v368 = vadd.f32 %v362, %v367
    %v369 = vadd.f32 %v365, %v367
    %v370 = vld [vmem:[%s1] sm:$0xff]
    %v371 = vld [vmem:[%s1 + $0x8] sm:$0xff]
    %v372 = vld [vmem:[#allocation5] sm:$0xff]
    %v373 = vld [vmem:[#allocation5 + $0x8] sm:$0xff]
    %v374 = vld [vmem:[#allocation5 + $0x10] sm:$0xff]
    %v375 = vld [vmem:[#allocation5 + $0x18] sm:$0xff]
    %v376 = vld [vmem:[#allocation5 + $0x20] sm:$0xff]
    %v377 = vld [vmem:[#allocation5 + $0x28] sm:$0xff]
    %v378 = vld [vmem:[#allocation5 + $0x30] sm:$0xff]
    %v379 = vld [vmem:[#allocation5 + $0x38] sm:$0xff]
    %v380 = vld [vmem:[#allocation5 + $0x40] sm:$0xff]
    %v381 = vld [vmem:[#allocation5 + $0x48] sm:$0xff]
    %v382 = vld [vmem:[#allocation5 + $0x50] sm:$0xff]
    %v383 = vld [vmem:[#allocation5 + $0x58] sm:$0xff]
    %v384 = vld [vmem:[#allocation5 + $0x60] sm:$0xff]
    %v385 = vld [vmem:[#allocation5 + $0x68] sm:$0xff]
    %v386 = vld [vmem:[#allocation5 + $0x70] sm:$0xff]
    %v387 = vld [vmem:[#allocation5 + $0x78] sm:$0xff]
    %v388 = vld [vmem:[#allocation5 + $0x80] sm:$0xff]
    %v389 = vld [vmem:[#allocation5 + $0x88] sm:$0xff]
    %v390 = vld [vmem:[#allocation5 + $0x90] sm:$0xff]
    %v391 = vld [vmem:[#allocation5 + $0x98] sm:$0xff]
    %v392 = vld [vmem:[#allocation5 + $0xa0] sm:$0xff]
    %v393 = vld [vmem:[#allocation5 + $0xa8] sm:$0xff]
    %v394 = vld [vmem:[#allocation5 + $0xb0] sm:$0xff]
    %v395 = vld [vmem:[#allocation5 + $0xb8] sm:$0xff]
    %v396 = vld [vmem:[#allocation5 + $0xc0] sm:$0xff]
    %v397 = vld [vmem:[#allocation5 + $0xc8] sm:$0xff]
    %v398 = vld [vmem:[#allocation5 + $0xd0] sm:$0xff]
    %v399 = vld [vmem:[#allocation5 + $0xd8] sm:$0xff]
    %v400 = vld [vmem:[#allocation5 + $0xe0] sm:$0xff]
    %v401 = vld [vmem:[#allocation5 + $0xe8] sm:$0xff]
    %v402 = vld [vmem:[#allocation5 + $0xf0] sm:$0xff]
    %v403 = vld [vmem:[#allocation5 + $0xf8] sm:$0xff]
    %v404 = vld [vmem:[#allocation5 + $0x100] sm:$0xff]
    %v405 = vld [vmem:[#allocation5 + $0x108] sm:$0xff]
    %v406 = vld [vmem:[#allocation5 + $0x110] sm:$0xff]
    %v407 = vld [vmem:[#allocation5 + $0x118] sm:$0xff]
    %v408 = vld [vmem:[#allocation5 + $0x120] sm:$0xf]
    %v409 = vld [vmem:[#allocation5 + $0x128] sm:$0xf]
    %v410 = vld [vmem:[#allocation5 + $0x130] sm:$0xf]
    %v411 = vld [vmem:[#allocation5 + $0x138] sm:$0xf]
    %v412 = vld [vmem:[#allocation5 + $0x140] sm:$0xf]
    %v413 = vld [vmem:[#allocation5 + $0x148] sm:$0xf]
    %v414 = vld [vmem:[#allocation5 + $0x150] sm:$0xf]
    %v415 = vld [vmem:[#allocation5 + $0x158] sm:$0xf]
    %v416 = vld [vmem:[#allocation5 + $0x160] sm:$0xf]
    %vm417 = vcmask 293888
    %v419 = vsel %vm417, %v370, 0
    %v422 = vsel %vm417, %v371, 0
    %vm424 = vcmask 1043456
    %v426 = vsel %vm424, %v408, 0
    %v429 = vsel %vm424, %v409, 0
    %v432 = vsel %vm424, %v410, 0
    %v435 = vsel %vm424, %v411, 0
    %v438 = vsel %vm424, %v412, 0
    %v441 = vsel %vm424, %v413, 0
    %v444 = vsel %vm424, %v414, 0
    %v447 = vsel %vm424, %v415, 0
    %v450 = vsel %vm424, %v416, 0
    %452 = vmatprep.subr.mxu0 %v373
    %453 = vmatpush1.msra.mxu0 %v372
    %454 = vmatprep.subr.mxu0 %v382
    %455 = vmatpush1.msra.mxu0 %v381
    %456 = vmatprep.subr.mxu0 %v391
    %457 = vmatpush1.msra.mxu0 %v390
    %458 = vmatprep.subr.mxu0 %v400
    %459 = vmatpush1.msra.mxu0 %v399
    %460 = vmatprep.subr.mxu0 %v429
    %461 = vmatpush1.msra.mxu0 %v426
    %462 = vmatprep.subr.mxu0 0.0
    %463 = vmatpush1.msra.mxu0 0.0
    %464 = vmatprep.subr.mxu0 0.0
    %465 = vmatpush1.msra.mxu0 0.0
    %466 = vmatprep.subr.mxu0 0.0
    %467 = vmatpush1.msra.mxu0 0.0
    %468 = vmatprep.subr.mxu0 0.0
    %469 = vmatpush1.msra.mxu0 0.0
    %470 = vmatprep.subr.mxu0 0.0
    %471 = vmatpush1.msra.mxu0 0.0
    %472 = vmatprep.subr.mxu0 0.0
    %473 = vmatpush1.msra.mxu0 0.0
    %474 = vmatprep.subr.mxu0 0.0
    %475 = vmatpush1.msra.mxu0 0.0
    %476 = vmatprep.subr.mxu0 0.0
    %477 = vmatpush1.msra.mxu0 0.0
    %478 = vmatprep.subr.mxu0 0.0
    %479 = vmatpush1.msra.mxu0 0.0
    %480 = vmatprep.subr.mxu0 0.0
    %481 = vmatpush1.msra.mxu0 0.0
    %482 = vmatprep.subr.mxu0 0.0
    %483 = vmatpush1.msra.mxu0 0.0
    %484 = vmatprep.subr.mxu0 0.0
    %485 = vmatpush1.msra.mxu0 0.0
    %486 = vmatprep.subr.mxu0 0.0
    %487 = vmatpush1.msra.mxu0 0.0
    %488 = vmatprep.subr.mxu0 0.0
    %489 = vmatpush1.msra.mxu0 0.0
    %490 = vmatprep.subr.mxu0 0.0
    %491 = vmatpush1.msra.mxu0 0.0
    %492 = vmatprep.subr.mxu0 0.0
    %493 = vmatpush1.msra.mxu0 0.0
    %494 = vmatprep.subr.mxu0 0.0
    %495 = vmatpush1.msra.mxu0 0.0
    %496 = vmatprep.subr.mxu0 0.0
    %497 = vmatpush1.msra.mxu0 0.0
    %498 = vmatprep.subr.mxu0 0.0
    %499 = vmatpush1.msra.mxu0 0.0
    %500 = vmatprep.subr.mxu0 0.0
    %501 = vmatpush1.msra.mxu0 0.0
    %502 = vmatprep.subr.mxu0 0.0
    %503 = vmatpush1.msra.mxu0 0.0
    %504 = vmatprep.subr.mxu0 0.0
    %505 = vmatpush1.msra.mxu0 0.0
    %506 = vmatprep.subr.mxu0 0.0
    %507 = vmatpush1.msra.mxu0 0.0
    %508 = vmatprep.subr.mxu0 0.0
    %509 = vmatpush1.msra.mxu0 0.0
    %510 = vmatprep.subr.mxu0 0.0
    %511 = vmatpush1.msra.mxu0 0.0
    %512 = vmatprep.subr.mxu0 0.0
    %513 = vmatpush1.msra.mxu0 0.0
    %514 = vmatprep.subr.mxu0 0.0
    %515 = vmatpush1.msra.mxu0 0.0
    %516 = vmatprep.mubr.f32.mxu0 0.0
    %517 = vmatmul.mubr.f32.gmra.mrb[0].mxu0 %v419
    %v518 = vpop.f32.mrb[0].mxu0
    %v519 = vadd.f32 0.0, %v518
    %v520 = vpop.f32.mrb[0].mxu0
    %v521 = vadd.f32 0.0, %v520
    %522 = vmatprep.mubr.f32.mxu0 0.0
    %523 = vmatmul.mubr.f32.gmra.mrb[0].mxu0 %v422
    %v524 = vpop.f32.mrb[0].mxu0
    %v525 = vadd.f32 0.0, %v524
    %v526 = vpop.f32.mrb[0].mxu0
    %v527 = vadd.f32 0.0, %v526
    %528 = vdwg.mxu0
    %529 = vmatprep.subr.mxu0 %v375
    %530 = vmatpush1.msra.mxu0 %v374
    %531 = vmatprep.subr.mxu0 %v384
    %532 = vmatpush1.msra.mxu0 %v383
    %533 = vmatprep.subr.mxu0 %v393
    %534 = vmatpush1.msra.mxu0 %v392
    %535 = vmatprep.subr.mxu0 %v402
    %536 = vmatpush1.msra.mxu0 %v401
    %537 = vmatprep.subr.mxu0 %v435
    %538 = vmatpush1.msra.mxu0 %v432
    %539 = vmatprep.subr.mxu0 0.0
    %540 = vmatpush1.msra.mxu0 0.0
    %541 = vmatprep.subr.mxu0 0.0
    %542 = vmatpush1.msra.mxu0 0.0
    %543 = vmatprep.subr.mxu0 0.0
    %544 = vmatpush1.msra.mxu0 0.0
    %545 = vmatprep.subr.mxu0 0.0
    %546 = vmatpush1.msra.mxu0 0.0
    %547 = vmatprep.subr.mxu0 0.0
    %548 = vmatpush1.msra.mxu0 0.0
    %549 = vmatprep.subr.mxu0 0.0
    %550 = vmatpush1.msra.mxu0 0.0
    %551 = vmatprep.subr.mxu0 0.0
    %552 = vmatpush1.msra.mxu0 0.0
    %553 = vmatprep.subr.mxu0 0.0
    %554 = vmatpush1.msra.mxu0 0.0
    %555 = vmatprep.subr.mxu0 0.0
    %556 = vmatpush1.msra.mxu0 0.0
    %557 = vmatprep.subr.mxu0 0.0
    %558 = vmatpush1.msra.mxu0 0.0
    %559 = vmatprep.subr.mxu0 0.0
    %560 = vmatpush1.msra.mxu0 0.0
    %561 = vmatprep.subr.mxu0 0.0
    %562 = vmatpush1.msra.mxu0 0.0
    %563 = vmatprep.subr.mxu0 0.0
    %564 = vmatpush1.msra.mxu0 0.0
    %565 = vmatprep.subr.mxu0 0.0
    %566 = vmatpush1.msra.mxu0 0.0
    %567 = vmatprep.subr.mxu0 0.0
    %568 = vmatpush1.msra.mxu0 0.0
    %569 = vmatprep.subr.mxu0 0.0
    %570 = vmatpush1.msra.mxu0 0.0
    %571 = vmatprep.subr.mxu0 0.0
    %572 = vmatpush1.msra.mxu0 0.0
    %573 = vmatprep.subr.mxu0 0.0
    %574 = vmatpush1.msra.mxu0 0.0
    %575 = vmatprep.subr.mxu0 0.0
    %576 = vmatpush1.msra.mxu0 0.0
    %577 = vmatprep.subr.mxu0 0.0
    %578 = vmatpush1.msra.mxu0 0.0
    %579 = vmatprep.subr.mxu0 0.0
    %580 = vmatpush1.msra.mxu0 0.0
    %581 = vmatprep.subr.mxu0 0.0
    %582 = vmatpush1.msra.mxu0 0.0
    %583 = vmatprep.subr.mxu0 0.0
    %584 = vmatpush1.msra.mxu0 0.0
    %585 = vmatprep.subr.mxu0 0.0
    %586 = vmatpush1.msra.mxu0 0.0
    %587 = vmatprep.subr.mxu0 0.0
    %588 = vmatpush1.msra.mxu0 0.0
    %589 = vmatprep.subr.mxu0 0.0
    %590 = vmatpush1.msra.mxu0 0.0
    %591 = vmatprep.subr.mxu0 0.0
    %592 = vmatpush1.msra.mxu0 0.0
    %593 = vmatprep.mubr.f32.mxu0 0.0
    %594 = vmatmul.mubr.f32.gmra.mrb[0].mxu0 %v419
    %v595 = vpop.f32.mrb[0].mxu0
    %v596 = vadd.f32 0.0, %v595
    %v597 = vpop.f32.mrb[0].mxu0
    %v598 = vadd.f32 0.0, %v597
    %599 = vmatprep.mubr.f32.mxu0 0.0
    %600 = vmatmul.mubr.f32.gmra.mrb[0].mxu0 %v422
    %v601 = vpop.f32.mrb[0].mxu0
    %v602 = vadd.f32 0.0, %v601
    %v603 = vpop.f32.mrb[0].mxu0
    %v604 = vadd.f32 0.0, %v603
    %605 = vdwg.mxu0
    %606 = vmatprep.subr.mxu0 %v377
    %607 = vmatpush1.msra.mxu0 %v376
    %608 = vmatprep.subr.mxu0 %v386
    %609 = vmatpush1.msra.mxu0 %v385
    %610 = vmatprep.subr.mxu0 %v395
    %611 = vmatpush1.msra.mxu0 %v394
    %612 = vmatprep.subr.mxu0 %v404
    %613 = vmatpush1.msra.mxu0 %v403
    %614 = vmatprep.subr.mxu0 %v441
    %615 = vmatpush1.msra.mxu0 %v438
    %616 = vmatprep.subr.mxu0 0.0
    %617 = vmatpush1.msra.mxu0 0.0
    %618 = vmatprep.subr.mxu0 0.0
    %619 = vmatpush1.msra.mxu0 0.0
    %620 = vmatprep.subr.mxu0 0.0
    %621 = vmatpush1.msra.mxu0 0.0
    %622 = vmatprep.subr.mxu0 0.0
    %623 = vmatpush1.msra.mxu0 0.0
    %624 = vmatprep.subr.mxu0 0.0
    %625 = vmatpush1.msra.mxu0 0.0
    %626 = vmatprep.subr.mxu0 0.0
    %627 = vmatpush1.msra.mxu0 0.0
    %628 = vmatprep.subr.mxu0 0.0
    %629 = vmatpush1.msra.mxu0 0.0
    %630 = vmatprep.subr.mxu0 0.0
    %631 = vmatpush1.msra.mxu0 0.0
    %632 = vmatprep.subr.mxu0 0.0
    %633 = vmatpush1.msra.mxu0 0.0
    %634 = vmatprep.subr.mxu0 0.0
    %635 = vmatpush1.msra.mxu0 0.0
    %636 = vmatprep.subr.mxu0 0.0
    %637 = vmatpush1.msra.mxu0 0.0
    %638 = vmatprep.subr.mxu0 0.0
    %639 = vmatpush1.msra.mxu0 0.0
    %640 = vmatprep.subr.mxu0 0.0
    %641 = vmatpush1.msra.mxu0 0.0
    %642 = vmatprep.subr.mxu0 0.0
    %643 = vmatpush1.msra.mxu0 0.0
    %644 = vmatprep.subr.mxu0 0.0
    %645 = vmatpush1.msra.mxu0 0.0
    %646 = vmatprep.subr.mxu0 0.0
    %647 = vmatpush1.msra.mxu0 0.0
    %648 = vmatprep.subr.mxu0 0.0
    %649 = vmatpush1.msra.mxu0 0.0
    %650 = vmatprep.subr.mxu0 0.0
    %651 = vmatpush1.msra.mxu0 0.0
    %652 = vmatprep.subr.mxu0 0.0
    %653 = vmatpush1.msra.mxu0 0.0
    %654 = vmatprep.subr.mxu0 0.0
    %655 = vmatpush1.msra.mxu0 0.0
    %656 = vmatprep.subr.mxu0 0.0
    %657 = vmatpush1.msra.mxu0 0.0
    %658 = vmatprep.subr.mxu0 0.0
    %659 = vmatpush1.msra.mxu0 0.0
    %660 = vmatprep.subr.mxu0 0.0
    %661 = vmatpush1.msra.mxu0 0.0
    %662 = vmatprep.subr.mxu0 0.0
    %663 = vmatpush1.msra.mxu0 0.0
    %664 = vmatprep.subr.mxu0 0.0
    %665 = vmatpush1.msra.mxu0 0.0
    %666 = vmatprep.subr.mxu0 0.0
    %667 = vmatpush1.msra.mxu0 0.0
    %668 = vmatprep.subr.mxu0 0.0
    %669 = vmatpush1.msra.mxu0 0.0
    %670 = vmatprep.mubr.f32.mxu0 0.0
    %671 = vmatmul.mubr.f32.gmra.mrb[0].mxu0 %v419
    %v672 = vpop.f32.mrb[0].mxu0
    %v673 = vadd.f32 0.0, %v672
    %v674 = vpop.f32.mrb[0].mxu0
    %v675 = vadd.f32 0.0, %v674
    %676 = vmatprep.mubr.f32.mxu0 0.0
    %677 = vmatmul.mubr.f32.gmra.mrb[0].mxu0 %v422
    %v678 = vpop.f32.mrb[0].mxu0
    %v679 = vadd.f32 0.0, %v678
    %v680 = vpop.f32.mrb[0].mxu0
    %v681 = vadd.f32 0.0, %v680
    %682 = vdwg.mxu0
    %683 = vmatprep.subr.mxu0 %v379
    %684 = vmatpush1.msra.mxu0 %v378
    %685 = vmatprep.subr.mxu0 %v388
    %686 = vmatpush1.msra.mxu0 %v387
    %687 = vmatprep.subr.mxu0 %v397
    %688 = vmatpush1.msra.mxu0 %v396
    %689 = vmatprep.subr.mxu0 %v406
    %690 = vmatpush1.msra.mxu0 %v405
    %691 = vmatprep.subr.mxu0 %v447
    %692 = vmatpush1.msra.mxu0 %v444
    %693 = vmatprep.subr.mxu0 0.0
    %694 = vmatpush1.msra.mxu0 0.0
    %695 = vmatprep.subr.mxu0 0.0
    %696 = vmatpush1.msra.mxu0 0.0
    %697 = vmatprep.subr.mxu0 0.0
    %698 = vmatpush1.msra.mxu0 0.0
    %699 = vmatprep.subr.mxu0 0.0
    %700 = vmatpush1.msra.mxu0 0.0
    %701 = vmatprep.subr.mxu0 0.0
    %702 = vmatpush1.msra.mxu0 0.0
    %703 = vmatprep.subr.mxu0 0.0
    %704 = vmatpush1.msra.mxu0 0.0
    %705 = vmatprep.subr.mxu0 0.0
    %706 = vmatpush1.msra.mxu0 0.0
    %707 = vmatprep.subr.mxu0 0.0
    %708 = vmatpush1.msra.mxu0 0.0
    %709 = vmatprep.subr.mxu0 0.0
    %710 = vmatpush1.msra.mxu0 0.0
    %711 = vmatprep.subr.mxu0 0.0
    %712 = vmatpush1.msra.mxu0 0.0
    %713 = vmatprep.subr.mxu0 0.0
    %714 = vmatpush1.msra.mxu0 0.0
    %715 = vmatprep.subr.mxu0 0.0
    %716 = vmatpush1.msra.mxu0 0.0
    %717 = vmatprep.subr.mxu0 0.0
    %718 = vmatpush1.msra.mxu0 0.0
    %719 = vmatprep.subr.mxu0 0.0
    %720 = vmatpush1.msra.mxu0 0.0
    %721 = vmatprep.subr.mxu0 0.0
    %722 = vmatpush1.msra.mxu0 0.0
    %723 = vmatprep.subr.mxu0 0.0
    %724 = vmatpush1.msra.mxu0 0.0
    %725 = vmatprep.subr.mxu0 0.0
    %726 = vmatpush1.msra.mxu0 0.0
    %727 = vmatprep.subr.mxu0 0.0
    %728 = vmatpush1.msra.mxu0 0.0
    %729 = vmatprep.subr.mxu0 0.0
    %730 = vmatpush1.msra.mxu0 0.0
    %731 = vmatprep.subr.mxu0 0.0
    %732 = vmatpush1.msra.mxu0 0.0
    %733 = vmatprep.subr.mxu0 0.0
    %734 = vmatpush1.msra.mxu0 0.0
    %735 = vmatprep.subr.mxu0 0.0
    %736 = vmatpush1.msra.mxu0 0.0
    %737 = vmatprep.subr.mxu0 0.0
    %738 = vmatpush1.msra.mxu0 0.0
    %739 = vmatprep.subr.mxu0 0.0
    %740 = vmatpush1.msra.mxu0 0.0
    %741 = vmatprep.subr.mxu0 0.0
    %742 = vmatpush1.msra.mxu0 0.0
    %743 = vmatprep.subr.mxu0 0.0
    %744 = vmatpush1.msra.mxu0 0.0
    %745 = vmatprep.subr.mxu0 0.0
    %746 = vmatpush1.msra.mxu0 0.0
    %747 = vmatprep.mubr.f32.mxu0 0.0
    %748 = vmatmul.mubr.f32.gmra.mrb[0].mxu0 %v419
    %v749 = vpop.f32.mrb[0].mxu0
    %v750 = vadd.f32 0.0, %v749
    %v751 = vpop.f32.mrb[0].mxu0
    %v752 = vadd.f32 0.0, %v751
    %753 = vmatprep.mubr.f32.mxu0 0.0
    %754 = vmatmul.mubr.f32.gmra.mrb[0].mxu0 %v422
    %v755 = vpop.f32.mrb[0].mxu0
    %v756 = vadd.f32 0.0, %v755
    %v757 = vpop.f32.mrb[0].mxu0
    %v758 = vadd.f32 0.0, %v757
    %759 = vdwg.mxu0
    %760 = vmatprep.subr.mxu0 0.0
    %761 = vmatpush1.msra.mxu0 %v380
    %762 = vmatprep.subr.mxu0 0.0
    %763 = vmatpush1.msra.mxu0 %v389
    %764 = vmatprep.subr.mxu0 0.0
    %765 = vmatpush1.msra.mxu0 %v398
    %766 = vmatprep.subr.mxu0 0.0
    %767 = vmatpush1.msra.mxu0 %v407
    %768 = vmatprep.subr.mxu0 0.0
    %769 = vmatpush1.msra.mxu0 %v450
    %770 = vmatprep.subr.mxu0 0.0
    %771 = vmatpush1.msra.mxu0 0.0
    %772 = vmatprep.subr.mxu0 0.0
    %773 = vmatpush1.msra.mxu0 0.0
    %774 = vmatprep.subr.mxu0 0.0
    %775 = vmatpush1.msra.mxu0 0.0
    %776 = vmatprep.subr.mxu0 0.0
    %777 = vmatpush1.msra.mxu0 0.0
    %778 = vmatprep.subr.mxu0 0.0
    %779 = vmatpush1.msra.mxu0 0.0
    %780 = vmatprep.subr.mxu0 0.0
    %781 = vmatpush1.msra.mxu0 0.0
    %782 = vmatprep.subr.mxu0 0.0
    %783 = vmatpush1.msra.mxu0 0.0
    %784 = vmatprep.subr.mxu0 0.0
    %785 = vmatpush1.msra.mxu0 0.0
    %786 = vmatprep.subr.mxu0 0.0
    %787 = vmatpush1.msra.mxu0 0.0
    %788 = vmatprep.subr.mxu0 0.0
    %789 = vmatpush1.msra.mxu0 0.0
    %790 = vmatprep.subr.mxu0 0.0
    %791 = vmatpush1.msra.mxu0 0.0
    %792 = vmatprep.subr.mxu0 0.0
    %793 = vmatpush1.msra.mxu0 0.0
    %794 = vmatprep.subr.mxu0 0.0
    %795 = vmatpush1.msra.mxu0 0.0
    %796 = vmatprep.subr.mxu0 0.0
    %797 = vmatpush1.msra.mxu0 0.0
    %798 = vmatprep.subr.mxu0 0.0
    %799 = vmatpush1.msra.mxu0 0.0
    %800 = vmatprep.subr.mxu0 0.0
    %801 = vmatpush1.msra.mxu0 0.0
    %802 = vmatprep.subr.mxu0 0.0
    %803 = vmatpush1.msra.mxu0 0.0
    %804 = vmatprep.subr.mxu0 0.0
    %805 = vmatpush1.msra.mxu0 0.0
    %806 = vmatprep.subr.mxu0 0.0
    %807 = vmatpush1.msra.mxu0 0.0
    %808 = vmatprep.subr.mxu0 0.0
    %809 = vmatpush1.msra.mxu0 0.0
    %810 = vmatprep.subr.mxu0 0.0
    %811 = vmatpush1.msra.mxu0 0.0
    %812 = vmatprep.subr.mxu0 0.0
    %813 = vmatpush1.msra.mxu0 0.0
    %814 = vmatprep.subr.mxu0 0.0
    %815 = vmatpush1.msra.mxu0 0.0
    %816 = vmatprep.subr.mxu0 0.0
    %817 = vmatpush1.msra.mxu0 0.0
    %818 = vmatprep.subr.mxu0 0.0
    %819 = vmatpush1.msra.mxu0 0.0
    %820 = vmatprep.subr.mxu0 0.0
    %821 = vmatpush1.msra.mxu0 0.0
    %822 = vmatprep.subr.mxu0 0.0
    %823 = vmatpush1.msra.mxu0 0.0
    %824 = vmatprep.mubr.f32.mxu0 0.0
    %825 = vmatmul.mubr.f32.gmra.mrb[0].mxu0 %v419
    %v826 = vpop.f32.mrb[0].mxu0
    %v827 = vadd.f32 0.0, %v826
    %v828 = vpop.f32.mrb[0].mxu0
    %829 = vmatprep.mubr.f32.mxu0 0.0
    %830 = vmatmul.mubr.f32.gmra.mrb[0].mxu0 %v422
    %v831 = vpop.f32.mrb[0].mxu0
    %v832 = vadd.f32 0.0, %v831
    %v833 = vpop.f32.mrb[0].mxu0
    %834 = vdwg.mxu0
    %v835 = vmul.f32 %v827, %v345
    %v836 = vmul.f32 %v832, %v346
    %v837 = vadd.f32 %v835, %v258
    %v838 = vadd.f32 %v836, %v264
    %v839 = vld [vmem:[%s6] sm:$0xff]
    %v840 = vld [vmem:[%s6 + $0x8] sm:$0xff]
    %v841 = vld [vmem:[%s6 + $0x10] sm:$0xff]
    %v842 = vld [vmem:[%s6 + $0x18] sm:$0xff]
    %v843 = vld [vmem:[%s6 + $0x20] sm:$0xff]
    %v844 = vld [vmem:[%s6 + $0x28] sm:$0xff]
    %v845 = vld [vmem:[%s6 + $0x30] sm:$0xff]
    %v846 = vld [vmem:[%s6 + $0x38] sm:$0xff]
    %v847 = vld [vmem:[%s6 + $0x40] sm:$0xff]
    %v848 = vld [vmem:[%s6 + $0x48] sm:$0xff]
    %v849 = vld [vmem:[%s6 + $0x50] sm:$0xff]
    %v850 = vld [vmem:[%s6 + $0x58] sm:$0xff]
    %v851 = vld [vmem:[%s6 + $0x60] sm:$0xff]
    %v852 = vld [vmem:[%s6 + $0x68] sm:$0xff]
    %v853 = vld [vmem:[%s6 + $0x70] sm:$0xff]
    %v854 = vld [vmem:[%s6 + $0x78] sm:$0xff]
    %v855 = vmul.f32 %v519, %v343
    %v856 = vmul.f32 %v525, %v344
    %v857 = vadd.f32 %v855, %v837
    %v858 = vadd.f32 %v856, %v838
    %vm859 = vcmp.gt.f32.partialorder %v857, 0.0
    %vm860 = vcmp.gt.f32.partialorder %v858, 0.0
    %v861 = vmul.f32 %v857, 1.442695
    %v862 = vpow.pop %v861
    %v863 = vmul.f32 %v858, 1.442695
    %v864 = vpow.pop %v863
    %v865 = vsub.f32 %v862, 1.0
    %v866 = vsub.f32 %v864, 1.0
    %v867 = vsel %vm859, %v857, %v865
    %v868 = vsel %vm860, %v858, %v866
    %v869 = vmul.f32 %v867, %v347
    %v870 = vmul.f32 %v868, %v348
    %871 = vmatprep.subr.mxu0 0.0
    %872 = vmatpush1.msra.mxu0 %v839
    %873 = vmatprep.subr.mxu0 0.0
    %874 = vmatpush1.msra.mxu0 %v840
    %875 = vmatprep.subr.mxu0 0.0
    %876 = vmatpush1.msra.mxu0 %v841
    %877 = vmatprep.subr.mxu0 0.0
    %878 = vmatpush1.msra.mxu0 %v842
    %879 = vmatprep.subr.mxu0 0.0
    %880 = vmatpush1.msra.mxu0 %v843
    %881 = vmatprep.subr.mxu0 0.0
    %882 = vmatpush1.msra.mxu0 %v844
    %883 = vmatprep.subr.mxu0 0.0
    %884 = vmatpush1.msra.mxu0 %v845
    %885 = vmatprep.subr.mxu0 0.0
    %886 = vmatpush1.msra.mxu0 %v846
    %887 = vmatprep.subr.mxu0 0.0
    %888 = vmatpush1.msra.mxu0 %v847
    %889 = vmatprep.subr.mxu0 0.0
    %890 = vmatpush1.msra.mxu0 %v848
    %891 = vmatprep.subr.mxu0 0.0
    %892 = vmatpush1.msra.mxu0 %v849
    %893 = vmatprep.subr.mxu0 0.0
    %894 = vmatpush1.msra.mxu0 %v850
    %895 = vmatprep.subr.mxu0 0.0
    %896 = vmatpush1.msra.mxu0 %v851
    %897 = vmatprep.subr.mxu0 0.0
    %898 = vmatpush1.msra.mxu0 %v852
    %899 = vmatprep.subr.mxu0 0.0
    %900 = vmatpush1.msra.mxu0 %v853
    %901 = vmatprep.subr.mxu0 0.0
    %902 = vmatpush1.msra.mxu0 %v854
    %903 = vmatprep.subr.mxu0 0.0
    %904 = vmatpush1.msra.mxu0 0.0
    %905 = vmatprep.subr.mxu0 0.0
    %906 = vmatpush1.msra.mxu0 0.0
    %907 = vmatprep.subr.mxu0 0.0
    %908 = vmatpush1.msra.mxu0 0.0
    %909 = vmatprep.subr.mxu0 0.0
    %910 = vmatpush1.msra.mxu0 0.0
    %911 = vmatprep.subr.mxu0 0.0
    %912 = vmatpush1.msra.mxu0 0.0
    %913 = vmatprep.subr.mxu0 0.0
    %914 = vmatpush1.msra.mxu0 0.0
    %915 = vmatprep.subr.mxu0 0.0
    %916 = vmatpush1.msra.mxu0 0.0
    %917 = vmatprep.subr.mxu0 0.0
    %918 = vmatpush1.msra.mxu0 0.0
    %919 = vmatprep.subr.mxu0 0.0
    %920 = vmatpush1.msra.mxu0 0.0
    %921 = vmatprep.subr.mxu0 0.0
    %922 = vmatpush1.msra.mxu0 0.0
    %923 = vmatprep.subr.mxu0 0.0
    %924 = vmatpush1.msra.mxu0 0.0
    %925 = vmatprep.subr.mxu0 0.0
    %926 = vmatpush1.msra.mxu0 0.0
    %927 = vmatprep.subr.mxu0 0.0
    %928 = vmatpush1.msra.mxu0 0.0
    %929 = vmatprep.subr.mxu0 0.0
    %930 = vmatpush1.msra.mxu0 0.0
    %931 = vmatprep.subr.mxu0 0.0
    %932 = vmatpush1.msra.mxu0 0.0
    %933 = vmatprep.subr.mxu0 0.0
    %934 = vmatpush1.msra.mxu0 0.0
    %935 = vmatprep.mubr.f32.mxu0 0.0
    %936 = vmatmul.mubr.f32.gmra.mrb[0].mxu0 %v869
    %v937 = vpop.f32.mrb[0].mxu0
    %v938 = vadd.f32 %v368, %v937
    %v939 = vpop.f32.mrb[0].mxu0
    %940 = vmatprep.mubr.f32.mxu0 0.0
    %941 = vmatmul.mubr.f32.gmra.mrb[0].mxu0 %v870
    %v942 = vpop.f32.mrb[0].mxu0
    %v943 = vadd.f32 %v369, %v942
    %v944 = vpop.f32.mrb[0].mxu0
    %945 = vdwg.mxu0
    %v946 = vand.u32 2147483647, %v938
    %v947 = vand.u32 2147483647, %v943
    %v948 = vadd.f32 %v946, 0.0
    %v949 = vadd.f32 %v947, 0.0
    %v950 = vmul.f32 %v521, %v343
    %v951 = vmul.f32 %v527, %v344
    %v952 = vadd.f32 %v950, %v837
    %v953 = vadd.f32 %v951, %v838
    %vm954 = vcmp.gt.f32.partialorder %v952, 0.0
    %vm955 = vcmp.gt.f32.partialorder %v953, 0.0
    %v956 = vmul.f32 %v952, 1.442695
    %v957 = vpow.pop %v956
    %v958 = vmul.f32 %v953, 1.442695
    %v959 = vpow.pop %v958
    %v960 = vsub.f32 %v957, 1.0
    %v961 = vsub.f32 %v959, 1.0
    %v962 = vsel %vm954, %v952, %v960
    %v963 = vsel %vm955, %v953, %v961
    %v964 = vmul.f32 %v962, %v347
    %v965 = vmul.f32 %v963, %v348
    %966 = vmatprep.subr.mxu0 0.0
    %967 = vmatpush1.msra.mxu0 %v839
    %968 = vmatprep.subr.mxu0 0.0
    %969 = vmatpush1.msra.mxu0 %v840
    %970 = vmatprep.subr.mxu0 0.0
    %971 = vmatpush1.msra.mxu0 %v841
    %972 = vmatprep.subr.mxu0 0.0
    %973 = vmatpush1.msra.mxu0 %v842
    %974 = vmatprep.subr.mxu0 0.0
    %975 = vmatpush1.msra.mxu0 %v843
    %976 = vmatprep.subr.mxu0 0.0
    %977 = vmatpush1.msra.mxu0 %v844
    %978 = vmatprep.subr.mxu0 0.0
    %979 = vmatpush1.msra.mxu0 %v845
    %980 = vmatprep.subr.mxu0 0.0
    %981 = vmatpush1.msra.mxu0 %v846
    %982 = vmatprep.subr.mxu0 0.0
    %983 = vmatpush1.msra.mxu0 %v847
    %984 = vmatprep.subr.mxu0 0.0
    %985 = vmatpush1.msra.mxu0 %v848
    %986 = vmatprep.subr.mxu0 0.0
    %987 = vmatpush1.msra.mxu0 %v849
    %988 = vmatprep.subr.mxu0 0.0
    %989 = vmatpush1.msra.mxu0 %v850
    %990 = vmatprep.subr.mxu0 0.0
    %991 = vmatpush1.msra.mxu0 %v851
    %992 = vmatprep.subr.mxu0 0.0
    %993 = vmatpush1.msra.mxu0 %v852
    %994 = vmatprep.subr.mxu0 0.0
    %995 = vmatpush1.msra.mxu0 %v853
    %996 = vmatprep.subr.mxu0 0.0
    %997 = vmatpush1.msra.mxu0 %v854
    %998 = vmatprep.subr.mxu0 0.0
    %999 = vmatpush1.msra.mxu0 0.0
    %1000 = vmatprep.subr.mxu0 0.0
    %1001 = vmatpush1.msra.mxu0 0.0
    %1002 = vmatprep.subr.mxu0 0.0
    %1003 = vmatpush1.msra.mxu0 0.0
    %1004 = vmatprep.subr.mxu0 0.0
    %1005 = vmatpush1.msra.mxu0 0.0
    %1006 = vmatprep.subr.mxu0 0.0
    %1007 = vmatpush1.msra.mxu0 0.0
    %1008 = vmatprep.subr.mxu0 0.0
    %1009 = vmatpush1.msra.mxu0 0.0
    %1010 = vmatprep.subr.mxu0 0.0
    %1011 = vmatpush1.msra.mxu0 0.0
    %1012 = vmatprep.subr.mxu0 0.0
    %1013 = vmatpush1.msra.mxu0 0.0
    %1014 = vmatprep.subr.mxu0 0.0
    %1015 = vmatpush1.msra.mxu0 0.0
    %1016 = vmatprep.subr.mxu0 0.0
    %1017 = vmatpush1.msra.mxu0 0.0
    %1018 = vmatprep.subr.mxu0 0.0
    %1019 = vmatpush1.msra.mxu0 0.0
    %1020 = vmatprep.subr.mxu0 0.0
    %1021 = vmatpush1.msra.mxu0 0.0
    %1022 = vmatprep.subr.mxu0 0.0
    %1023 = vmatpush1.msra.mxu0 0.0
    %1024 = vmatprep.subr.mxu0 0.0
    %1025 = vmatpush1.msra.mxu0 0.0
    %1026 = vmatprep.subr.mxu0 0.0
    %1027 = vmatpush1.msra.mxu0 0.0
    %1028 = vmatprep.subr.mxu0 0.0
    %1029 = vmatpush1.msra.mxu0 0.0
    %1030 = vmatprep.mubr.f32.mxu0 0.0
    %1031 = vmatmul.mubr.f32.gmra.mrb[0].mxu0 %v964
    %v1032 = vpop.f32.mrb[0].mxu0
    %v1033 = vadd.f32 %v368, %v1032
    %v1034 = vpop.f32.mrb[0].mxu0
    %1035 = vmatprep.mubr.f32.mxu0 0.0
    %1036 = vmatmul.mubr.f32.gmra.mrb[0].mxu0 %v965
    %v1037 = vpop.f32.mrb[0].mxu0
    %v1038 = vadd.f32 %v369, %v1037
    %v1039 = vpop.f32.mrb[0].mxu0
    %1040 = vdwg.mxu0
    %v1041 = vand.u32 2147483647, %v1033
    %v1042 = vand.u32 2147483647, %v1038
    %v1043 = vadd.f32 %v948, %v1041
    %v1044 = vadd.f32 %v949, %v1042
    %v1045 = vmul.f32 %v596, %v343
    %v1046 = vmul.f32 %v602, %v344
    %v1047 = vadd.f32 %v1045, %v837
    %v1048 = vadd.f32 %v1046, %v838
    %vm1049 = vcmp.gt.f32.partialorder %v1047, 0.0
    %vm1050 = vcmp.gt.f32.partialorder %v1048, 0.0
    %v1051 = vmul.f32 %v1047, 1.442695
    %v1052 = vpow.pop %v1051
    %v1053 = vmul.f32 %v1048, 1.442695
    %v1054 = vpow.pop %v1053
    %v1055 = vsub.f32 %v1052, 1.0
    %v1056 = vsub.f32 %v1054, 1.0
    %v1057 = vsel %vm1049, %v1047, %v1055
    %v1058 = vsel %vm1050, %v1048, %v1056
    %v1059 = vmul.f32 %v1057, %v347
    %v1060 = vmul.f32 %v1058, %v348
    %1061 = vmatprep.subr.mxu0 0.0
    %1062 = vmatpush1.msra.mxu0 %v839
    %1063 = vmatprep.subr.mxu0 0.0
    %1064 = vmatpush1.msra.mxu0 %v840
    %1065 = vmatprep.subr.mxu0 0.0
    %1066 = vmatpush1.msra.mxu0 %v841
    %1067 = vmatprep.subr.mxu0 0.0
    %1068 = vmatpush1.msra.mxu0 %v842
    %1069 = vmatprep.subr.mxu0 0.0
    %1070 = vmatpush1.msra.mxu0 %v843
    %1071 = vmatprep.subr.mxu0 0.0
    %1072 = vmatpush1.msra.mxu0 %v844
    %1073 = vmatprep.subr.mxu0 0.0
    %1074 = vmatpush1.msra.mxu0 %v845
    %1075 = vmatprep.subr.mxu0 0.0
    %1076 = vmatpush1.msra.mxu0 %v846
    %1077 = vmatprep.subr.mxu0 0.0
    %1078 = vmatpush1.msra.mxu0 %v847
    %1079 = vmatprep.subr.mxu0 0.0
    %1080 = vmatpush1.msra.mxu0 %v848
    %1081 = vmatprep.subr.mxu0 0.0
    %1082 = vmatpush1.msra.mxu0 %v849
    %1083 = vmatprep.subr.mxu0 0.0
    %1084 = vmatpush1.msra.mxu0 %v850
    %1085 = vmatprep.subr.mxu0 0.0
    %1086 = vmatpush1.msra.mxu0 %v851
    %1087 = vmatprep.subr.mxu0 0.0
    %1088 = vmatpush1.msra.mxu0 %v852
    %1089 = vmatprep.subr.mxu0 0.0
    %1090 = vmatpush1.msra.mxu0 %v853
    %1091 = vmatprep.subr.mxu0 0.0
    %1092 = vmatpush1.msra.mxu0 %v854
    %1093 = vmatprep.subr.mxu0 0.0
    %1094 = vmatpush1.msra.mxu0 0.0
    %1095 = vmatprep.subr.mxu0 0.0
    %1096 = vmatpush1.msra.mxu0 0.0
    %1097 = vmatprep.subr.mxu0 0.0
    %1098 = vmatpush1.msra.mxu0 0.0
    %1099 = vmatprep.subr.mxu0 0.0
    %1100 = vmatpush1.msra.mxu0 0.0
    %1101 = vmatprep.subr.mxu0 0.0
    %1102 = vmatpush1.msra.mxu0 0.0
    %1103 = vmatprep.subr.mxu0 0.0
    %1104 = vmatpush1.msra.mxu0 0.0
    %1105 = vmatprep.subr.mxu0 0.0
    %1106 = vmatpush1.msra.mxu0 0.0
    %1107 = vmatprep.subr.mxu0 0.0
    %1108 = vmatpush1.msra.mxu0 0.0
    %1109 = vmatprep.subr.mxu0 0.0
    %1110 = vmatpush1.msra.mxu0 0.0
    %1111 = vmatprep.subr.mxu0 0.0
    %1112 = vmatpush1.msra.mxu0 0.0
    %1113 = vmatprep.subr.mxu0 0.0
    %1114 = vmatpush1.msra.mxu0 0.0
    %1115 = vmatprep.subr.mxu0 0.0
    %1116 = vmatpush1.msra.mxu0 0.0
    %1117 = vmatprep.subr.mxu0 0.0
    %1118 = vmatpush1.msra.mxu0 0.0
    %1119 = vmatprep.subr.mxu0 0.0
    %1120 = vmatpush1.msra.mxu0 0.0
    %1121 = vmatprep.subr.mxu0 0.0
    %1122 = vmatpush1.msra.mxu0 0.0
    %1123 = vmatprep.subr.mxu0 0.0
    %1124 = vmatpush1.msra.mxu0 0.0
    %1125 = vmatprep.mubr.f32.mxu0 0.0
    %1126 = vmatmul.mubr.f32.gmra.mrb[0].mxu0 %v1059
    %v1127 = vpop.f32.mrb[0].mxu0
    %v1128 = vadd.f32 %v368, %v1127
    %v1129 = vpop.f32.mrb[0].mxu0
    %1130 = vmatprep.mubr.f32.mxu0 0.0
    %1131 = vmatmul.mubr.f32.gmra.mrb[0].mxu0 %v1060
    %v1132 = vpop.f32.mrb[0].mxu0
    %v1133 = vadd.f32 %v369, %v1132
    %v1134 = vpop.f32.mrb[0].mxu0
    %1135 = vdwg.mxu0
    %v1136 = vand.u32 2147483647, %v1128
    %v1137 = vand.u32 2147483647, %v1133
    %v1138 = vadd.f32 %v1043, %v1136
    %v1139 = vadd.f32 %v1044, %v1137
    %v1140 = vmul.f32 %v598, %v343
    %v1141 = vmul.f32 %v604, %v344
    %v1142 = vadd.f32 %v1140, %v837
    %v1143 = vadd.f32 %v1141, %v838
    %vm1144 = vcmp.gt.f32.partialorder %v1142, 0.0
    %vm1145 = vcmp.gt.f32.partialorder %v1143, 0.0
    %v1146 = vmul.f32 %v1142, 1.442695
    %v1147 = vpow.pop %v1146
    %v1148 = vmul.f32 %v1143, 1.442695
    %v1149 = vpow.pop %v1148
    %v1150 = vsub.f32 %v1147, 1.0
    %v1151 = vsub.f32 %v1149, 1.0
    %v1152 = vsel %vm1144, %v1142, %v1150
    %v1153 = vsel %vm1145, %v1143, %v1151
    %v1154 = vmul.f32 %v1152, %v347
    %v1155 = vmul.f32 %v1153, %v348
    %1156 = vmatprep.subr.mxu0 0.0
    %1157 = vmatpush1.msra.mxu0 %v839
    %1158 = vmatprep.subr.mxu0 0.0
    %1159 = vmatpush1.msra.mxu0 %v840
    %1160 = vmatprep.subr.mxu0 0.0
    %1161 = vmatpush1.msra.mxu0 %v841
    %1162 = vmatprep.subr.mxu0 0.0
    %1163 = vmatpush1.msra.mxu0 %v842
    %1164 = vmatprep.subr.mxu0 0.0
    %1165 = vmatpush1.msra.mxu0 %v843
    %1166 = vmatprep.subr.mxu0 0.0
    %1167 = vmatpush1.msra.mxu0 %v844
    %1168 = vmatprep.subr.mxu0 0.0
    %1169 = vmatpush1.msra.mxu0 %v845
    %1170 = vmatprep.subr.mxu0 0.0
    %1171 = vmatpush1.msra.mxu0 %v846
    %1172 = vmatprep.subr.mxu0 0.0
    %1173 = vmatpush1.msra.mxu0 %v847
    %1174 = vmatprep.subr.mxu0 0.0
    %1175 = vmatpush1.msra.mxu0 %v848
    %1176 = vmatprep.subr.mxu0 0.0
    %1177 = vmatpush1.msra.mxu0 %v849
    %1178 = vmatprep.subr.mxu0 0.0
    %1179 = vmatpush1.msra.mxu0 %v850
    %1180 = vmatprep.subr.mxu0 0.0
    %1181 = vmatpush1.msra.mxu0 %v851
    %1182 = vmatprep.subr.mxu0 0.0
    %1183 = vmatpush1.msra.mxu0 %v852
    %1184 = vmatprep.subr.mxu0 0.0
    %1185 = vmatpush1.msra.mxu0 %v853
    %1186 = vmatprep.subr.mxu0 0.0
    %1187 = vmatpush1.msra.mxu0 %v854
    %1188 = vmatprep.subr.mxu0 0.0
    %1189 = vmatpush1.msra.mxu0 0.0
    %1190 = vmatprep.subr.mxu0 0.0
    %1191 = vmatpush1.msra.mxu0 0.0
    %1192 = vmatprep.subr.mxu0 0.0
    %1193 = vmatpush1.msra.mxu0 0.0
    %1194 = vmatprep.subr.mxu0 0.0
    %1195 = vmatpush1.msra.mxu0 0.0
    %1196 = vmatprep.subr.mxu0 0.0
    %1197 = vmatpush1.msra.mxu0 0.0
    %1198 = vmatprep.subr.mxu0 0.0
    %1199 = vmatpush1.msra.mxu0 0.0
    %1200 = vmatprep.subr.mxu0 0.0
    %1201 = vmatpush1.msra.mxu0 0.0
    %1202 = vmatprep.subr.mxu0 0.0
    %1203 = vmatpush1.msra.mxu0 0.0
    %1204 = vmatprep.subr.mxu0 0.0
    %1205 = vmatpush1.msra.mxu0 0.0
    %1206 = vmatprep.subr.mxu0 0.0
    %1207 = vmatpush1.msra.mxu0 0.0
    %1208 = vmatprep.subr.mxu0 0.0
    %1209 = vmatpush1.msra.mxu0 0.0
    %1210 = vmatprep.subr.mxu0 0.0
    %1211 = vmatpush1.msra.mxu0 0.0
    %1212 = vmatprep.subr.mxu0 0.0
    %1213 = vmatpush1.msra.mxu0 0.0
    %1214 = vmatprep.subr.mxu0 0.0
    %1215 = vmatpush1.msra.mxu0 0.0
    %1216 = vmatprep.subr.mxu0 0.0
    %1217 = vmatpush1.msra.mxu0 0.0
    %1218 = vmatprep.subr.mxu0 0.0
    %1219 = vmatpush1.msra.mxu0 0.0
    %1220 = vmatprep.mubr.f32.mxu0 0.0
    %1221 = vmatmul.mubr.f32.gmra.mrb[0].mxu0 %v1154
    %v1222 = vpop.f32.mrb[0].mxu0
    %v1223 = vadd.f32 %v368, %v1222
    %v1224 = vpop.f32.mrb[0].mxu0
    %1225 = vmatprep.mubr.f32.mxu0 0.0
    %1226 = vmatmul.mubr.f32.gmra.mrb[0].mxu0 %v1155
    %v1227 = vpop.f32.mrb[0].mxu0
    %v1228 = vadd.f32 %v369, %v1227
    %v1229 = vpop.f32.mrb[0].mxu0
    %1230 = vdwg.mxu0
    %v1231 = vand.u32 2147483647, %v1223
    %v1232 = vand.u32 2147483647, %v1228
    %v1233 = vadd.f32 %v1138, %v1231
    %v1234 = vadd.f32 %v1139, %v1232
    %v1235 = vmul.f32 %v673, %v343
    %v1236 = vmul.f32 %v679, %v344
    %v1237 = vadd.f32 %v1235, %v837
    %v1238 = vadd.f32 %v1236, %v838
    %vm1239 = vcmp.gt.f32.partialorder %v1237, 0.0
    %vm1240 = vcmp.gt.f32.partialorder %v1238, 0.0
    %v1241 = vmul.f32 %v1237, 1.442695
    %v1242 = vpow.pop %v1241
    %v1243 = vmul.f32 %v1238, 1.442695
    %v1244 = vpow.pop %v1243
    %v1245 = vsub.f32 %v1242, 1.0
    %v1246 = vsub.f32 %v1244, 1.0
    %v1247 = vsel %vm1239, %v1237, %v1245
    %v1248 = vsel %vm1240, %v1238, %v1246
    %v1249 = vmul.f32 %v1247, %v347
    %v1250 = vmul.f32 %v1248, %v348
    %1251 = vmatprep.subr.mxu0 0.0
    %1252 = vmatpush1.msra.mxu0 %v839
    %1253 = vmatprep.subr.mxu0 0.0
    %1254 = vmatpush1.msra.mxu0 %v840
    %1255 = vmatprep.subr.mxu0 0.0
    %1256 = vmatpush1.msra.mxu0 %v841
    %1257 = vmatprep.subr.mxu0 0.0
    %1258 = vmatpush1.msra.mxu0 %v842
    %1259 = vmatprep.subr.mxu0 0.0
    %1260 = vmatpush1.msra.mxu0 %v843
    %1261 = vmatprep.subr.mxu0 0.0
    %1262 = vmatpush1.msra.mxu0 %v844
    %1263 = vmatprep.subr.mxu0 0.0
    %1264 = vmatpush1.msra.mxu0 %v845
    %1265 = vmatprep.subr.mxu0 0.0
    %1266 = vmatpush1.msra.mxu0 %v846
    %1267 = vmatprep.subr.mxu0 0.0
    %1268 = vmatpush1.msra.mxu0 %v847
    %1269 = vmatprep.subr.mxu0 0.0
    %1270 = vmatpush1.msra.mxu0 %v848
    %1271 = vmatprep.subr.mxu0 0.0
    %1272 = vmatpush1.msra.mxu0 %v849
    %1273 = vmatprep.subr.mxu0 0.0
    %1274 = vmatpush1.msra.mxu0 %v850
    %1275 = vmatprep.subr.mxu0 0.0
    %1276 = vmatpush1.msra.mxu0 %v851
    %1277 = vmatprep.subr.mxu0 0.0
    %1278 = vmatpush1.msra.mxu0 %v852
    %1279 = vmatprep.subr.mxu0 0.0
    %1280 = vmatpush1.msra.mxu0 %v853
    %1281 = vmatprep.subr.mxu0 0.0
    %1282 = vmatpush1.msra.mxu0 %v854
    %1283 = vmatprep.subr.mxu0 0.0
    %1284 = vmatpush1.msra.mxu0 0.0
    %1285 = vmatprep.subr.mxu0 0.0
    %1286 = vmatpush1.msra.mxu0 0.0
    %1287 = vmatprep.subr.mxu0 0.0
    %1288 = vmatpush1.msra.mxu0 0.0
    %1289 = vmatprep.subr.mxu0 0.0
    %1290 = vmatpush1.msra.mxu0 0.0
    %1291 = vmatprep.subr.mxu0 0.0
    %1292 = vmatpush1.msra.mxu0 0.0
    %1293 = vmatprep.subr.mxu0 0.0
    %1294 = vmatpush1.msra.mxu0 0.0
    %1295 = vmatprep.subr.mxu0 0.0
    %1296 = vmatpush1.msra.mxu0 0.0
    %1297 = vmatprep.subr.mxu0 0.0
    %1298 = vmatpush1.msra.mxu0 0.0
    %1299 = vmatprep.subr.mxu0 0.0
    %1300 = vmatpush1.msra.mxu0 0.0
    %1301 = vmatprep.subr.mxu0 0.0
    %1302 = vmatpush1.msra.mxu0 0.0
    %1303 = vmatprep.subr.mxu0 0.0
    %1304 = vmatpush1.msra.mxu0 0.0
    %1305 = vmatprep.subr.mxu0 0.0
    %1306 = vmatpush1.msra.mxu0 0.0
    %1307 = vmatprep.subr.mxu0 0.0
    %1308 = vmatpush1.msra.mxu0 0.0
    %1309 = vmatprep.subr.mxu0 0.0
    %1310 = vmatpush1.msra.mxu0 0.0
    %1311 = vmatprep.subr.mxu0 0.0
    %1312 = vmatpush1.msra.mxu0 0.0
    %1313 = vmatprep.subr.mxu0 0.0
    %1314 = vmatpush1.msra.mxu0 0.0
    %1315 = vmatprep.mubr.f32.mxu0 0.0
    %1316 = vmatmul.mubr.f32.gmra.mrb[0].mxu0 %v1249
    %v1317 = vpop.f32.mrb[0].mxu0
    %v1318 = vadd.f32 %v368, %v1317
    %v1319 = vpop.f32.mrb[0].mxu0
    %1320 = vmatprep.mubr.f32.mxu0 0.0
    %1321 = vmatmul.mubr.f32.gmra.mrb[0].mxu0 %v1250
    %v1322 = vpop.f32.mrb[0].mxu0
    %v1323 = vadd.f32 %v369, %v1322
    %v1324 = vpop.f32.mrb[0].mxu0
    %1325 = vdwg.mxu0
    %v1326 = vand.u32 2147483647, %v1318
    %v1327 = vand.u32 2147483647, %v1323
    %v1328 = vadd.f32 %v1233, %v1326
    %v1329 = vadd.f32 %v1234, %v1327
    %v1330 = vmul.f32 %v675, %v343
    %v1331 = vmul.f32 %v681, %v344
    %v1332 = vadd.f32 %v1330, %v837
    %v1333 = vadd.f32 %v1331, %v838
    %vm1334 = vcmp.gt.f32.partialorder %v1332, 0.0
    %vm1335 = vcmp.gt.f32.partialorder %v1333, 0.0
    %v1336 = vmul.f32 %v1332, 1.442695
    %v1337 = vpow.pop %v1336
    %v1338 = vmul.f32 %v1333, 1.442695
    %v1339 = vpow.pop %v1338
    %v1340 = vsub.f32 %v1337, 1.0
    %v1341 = vsub.f32 %v1339, 1.0
    %v1342 = vsel %vm1334, %v1332, %v1340
    %v1343 = vsel %vm1335, %v1333, %v1341
    %v1344 = vmul.f32 %v1342, %v347
    %v1345 = vmul.f32 %v1343, %v348
    %1346 = vmatprep.subr.mxu0 0.0
    %1347 = vmatpush1.msra.mxu0 %v839
    %1348 = vmatprep.subr.mxu0 0.0
    %1349 = vmatpush1.msra.mxu0 %v840
    %1350 = vmatprep.subr.mxu0 0.0
    %1351 = vmatpush1.msra.mxu0 %v841
    %1352 = vmatprep.subr.mxu0 0.0
    %1353 = vmatpush1.msra.mxu0 %v842
    %1354 = vmatprep.subr.mxu0 0.0
    %1355 = vmatpush1.msra.mxu0 %v843
    %1356 = vmatprep.subr.mxu0 0.0
    %1357 = vmatpush1.msra.mxu0 %v844
    %1358 = vmatprep.subr.mxu0 0.0
    %1359 = vmatpush1.msra.mxu0 %v845
    %1360 = vmatprep.subr.mxu0 0.0
    %1361 = vmatpush1.msra.mxu0 %v846
    %1362 = vmatprep.subr.mxu0 0.0
    %1363 = vmatpush1.msra.mxu0 %v847
    %1364 = vmatprep.subr.mxu0 0.0
    %1365 = vmatpush1.msra.mxu0 %v848
    %1366 = vmatprep.subr.mxu0 0.0
    %1367 = vmatpush1.msra.mxu0 %v849
    %1368 = vmatprep.subr.mxu0 0.0
    %1369 = vmatpush1.msra.mxu0 %v850
    %1370 = vmatprep.subr.mxu0 0.0
    %1371 = vmatpush1.msra.mxu0 %v851
    %1372 = vmatprep.subr.mxu0 0.0
    %1373 = vmatpush1.msra.mxu0 %v852
    %1374 = vmatprep.subr.mxu0 0.0
    %1375 = vmatpush1.msra.mxu0 %v853
    %1376 = vmatprep.subr.mxu0 0.0
    %1377 = vmatpush1.msra.mxu0 %v854
    %1378 = vmatprep.subr.mxu0 0.0
    %1379 = vmatpush1.msra.mxu0 0.0
    %1380 = vmatprep.subr.mxu0 0.0
    %1381 = vmatpush1.msra.mxu0 0.0
    %1382 = vmatprep.subr.mxu0 0.0
    %1383 = vmatpush1.msra.mxu0 0.0
    %1384 = vmatprep.subr.mxu0 0.0
    %1385 = vmatpush1.msra.mxu0 0.0
    %1386 = vmatprep.subr.mxu0 0.0
    %1387 = vmatpush1.msra.mxu0 0.0
    %1388 = vmatprep.subr.mxu0 0.0
    %1389 = vmatpush1.msra.mxu0 0.0
    %1390 = vmatprep.subr.mxu0 0.0
    %1391 = vmatpush1.msra.mxu0 0.0
    %1392 = vmatprep.subr.mxu0 0.0
    %1393 = vmatpush1.msra.mxu0 0.0
    %1394 = vmatprep.subr.mxu0 0.0
    %1395 = vmatpush1.msra.mxu0 0.0
    %1396 = vmatprep.subr.mxu0 0.0
    %1397 = vmatpush1.msra.mxu0 0.0
    %1398 = vmatprep.subr.mxu0 0.0
    %1399 = vmatpush1.msra.mxu0 0.0
    %1400 = vmatprep.subr.mxu0 0.0
    %1401 = vmatpush1.msra.mxu0 0.0
    %1402 = vmatprep.subr.mxu0 0.0
    %1403 = vmatpush1.msra.mxu0 0.0
    %1404 = vmatprep.subr.mxu0 0.0
    %1405 = vmatpush1.msra.mxu0 0.0
    %1406 = vmatprep.subr.mxu0 0.0
    %1407 = vmatpush1.msra.mxu0 0.0
    %1408 = vmatprep.subr.mxu0 0.0
    %1409 = vmatpush1.msra.mxu0 0.0
    %1410 = vmatprep.mubr.f32.mxu0 0.0
    %1411 = vmatmul.mubr.f32.gmra.mrb[0].mxu0 %v1344
    %v1412 = vpop.f32.mrb[0].mxu0
    %v1413 = vadd.f32 %v368, %v1412
    %v1414 = vpop.f32.mrb[0].mxu0
    %1415 = vmatprep.mubr.f32.mxu0 0.0
    %1416 = vmatmul.mubr.f32.gmra.mrb[0].mxu0 %v1345
    %v1417 = vpop.f32.mrb[0].mxu0
    %v1418 = vadd.f32 %v369, %v1417
    %v1419 = vpop.f32.mrb[0].mxu0
    %1420 = vdwg.mxu0
    %v1421 = vand.u32 2147483647, %v1413
    %v1422 = vand.u32 2147483647, %v1418
    %v1423 = vadd.f32 %v1328, %v1421
    %v1424 = vadd.f32 %v1329, %v1422
    %v1425 = vmul.f32 %v750, %v343
    %v1426 = vmul.f32 %v756, %v344
    %v1427 = vadd.f32 %v1425, %v837
    %v1428 = vadd.f32 %v1426, %v838
    %vm1429 = vcmp.gt.f32.partialorder %v1427, 0.0
    %vm1430 = vcmp.gt.f32.partialorder %v1428, 0.0
    %v1431 = vmul.f32 %v1427, 1.442695
    %v1432 = vpow.pop %v1431
    %v1433 = vmul.f32 %v1428, 1.442695
    %v1434 = vpow.pop %v1433
    %v1435 = vsub.f32 %v1432, 1.0
    %v1436 = vsub.f32 %v1434, 1.0
    %v1437 = vsel %vm1429, %v1427, %v1435
    %v1438 = vsel %vm1430, %v1428, %v1436
    %v1439 = vmul.f32 %v1437, %v347
    %v1440 = vmul.f32 %v1438, %v348
    %1441 = vmatprep.subr.mxu0 0.0
    %1442 = vmatpush1.msra.mxu0 %v839
    %1443 = vmatprep.subr.mxu0 0.0
    %1444 = vmatpush1.msra.mxu0 %v840
    %1445 = vmatprep.subr.mxu0 0.0
    %1446 = vmatpush1.msra.mxu0 %v841
    %1447 = vmatprep.subr.mxu0 0.0
    %1448 = vmatpush1.msra.mxu0 %v842
    %1449 = vmatprep.subr.mxu0 0.0
    %1450 = vmatpush1.msra.mxu0 %v843
    %1451 = vmatprep.subr.mxu0 0.0
    %1452 = vmatpush1.msra.mxu0 %v844
    %1453 = vmatprep.subr.mxu0 0.0
    %1454 = vmatpush1.msra.mxu0 %v845
    %1455 = vmatprep.subr.mxu0 0.0
    %1456 = vmatpush1.msra.mxu0 %v846
    %1457 = vmatprep.subr.mxu0 0.0
    %1458 = vmatpush1.msra.mxu0 %v847
    %1459 = vmatprep.subr.mxu0 0.0
    %1460 = vmatpush1.msra.mxu0 %v848
    %1461 = vmatprep.subr.mxu0 0.0
    %1462 = vmatpush1.msra.mxu0 %v849
    %1463 = vmatprep.subr.mxu0 0.0
    %1464 = vmatpush1.msra.mxu0 %v850
    %1465 = vmatprep.subr.mxu0 0.0
    %1466 = vmatpush1.msra.mxu0 %v851
    %1467 = vmatprep.subr.mxu0 0.0
    %1468 = vmatpush1.msra.mxu0 %v852
    %1469 = vmatprep.subr.mxu0 0.0
    %1470 = vmatpush1.msra.mxu0 %v853
    %1471 = vmatprep.subr.mxu0 0.0
    %1472 = vmatpush1.msra.mxu0 %v854
    %1473 = vmatprep.subr.mxu0 0.0
    %1474 = vmatpush1.msra.mxu0 0.0
    %1475 = vmatprep.subr.mxu0 0.0
    %1476 = vmatpush1.msra.mxu0 0.0
    %1477 = vmatprep.subr.mxu0 0.0
    %1478 = vmatpush1.msra.mxu0 0.0
    %1479 = vmatprep.subr.mxu0 0.0
    %1480 = vmatpush1.msra.mxu0 0.0
    %1481 = vmatprep.subr.mxu0 0.0
    %1482 = vmatpush1.msra.mxu0 0.0
    %1483 = vmatprep.subr.mxu0 0.0
    %1484 = vmatpush1.msra.mxu0 0.0
    %1485 = vmatprep.subr.mxu0 0.0
    %1486 = vmatpush1.msra.mxu0 0.0
    %1487 = vmatprep.subr.mxu0 0.0
    %1488 = vmatpush1.msra.mxu0 0.0
    %1489 = vmatprep.subr.mxu0 0.0
    %1490 = vmatpush1.msra.mxu0 0.0
    %1491 = vmatprep.subr.mxu0 0.0
    %1492 = vmatpush1.msra.mxu0 0.0
    %1493 = vmatprep.subr.mxu0 0.0
    %1494 = vmatpush1.msra.mxu0 0.0
    %1495 = vmatprep.subr.mxu0 0.0
    %1496 = vmatpush1.msra.mxu0 0.0
    %1497 = vmatprep.subr.mxu0 0.0
    %1498 = vmatpush1.msra.mxu0 0.0
    %1499 = vmatprep.subr.mxu0 0.0
    %1500 = vmatpush1.msra.mxu0 0.0
    %1501 = vmatprep.subr.mxu0 0.0
    %1502 = vmatpush1.msra.mxu0 0.0
    %1503 = vmatprep.subr.mxu0 0.0
    %1504 = vmatpush1.msra.mxu0 0.0
    %1505 = vmatprep.mubr.f32.mxu0 0.0
    %1506 = vmatmul.mubr.f32.gmra.mrb[0].mxu0 %v1439
    %v1507 = vpop.f32.mrb[0].mxu0
    %v1508 = vadd.f32 %v368, %v1507
    %v1509 = vpop.f32.mrb[0].mxu0
    %1510 = vmatprep.mubr.f32.mxu0 0.0
    %1511 = vmatmul.mubr.f32.gmra.mrb[0].mxu0 %v1440
    %v1512 = vpop.f32.mrb[0].mxu0
    %v1513 = vadd.f32 %v369, %v1512
    %v1514 = vpop.f32.mrb[0].mxu0
    %1515 = vdwg.mxu0
    %v1516 = vand.u32 2147483647, %v1508
    %v1517 = vand.u32 2147483647, %v1513
    %v1518 = vadd.f32 %v1423, %v1516
    %v1519 = vadd.f32 %v1424, %v1517
    %v1520 = vmul.f32 %v752, %v343
    %v1521 = vmul.f32 %v758, %v344
    %v1522 = vadd.f32 %v1520, %v837
    %v1523 = vadd.f32 %v1521, %v838
    %vm1524 = vcmp.gt.f32.partialorder %v1522, 0.0
    %vm1525 = vcmp.gt.f32.partialorder %v1523, 0.0
    %v1526 = vmul.f32 %v1522, 1.442695
    %v1527 = vpow.pop %v1526
    %v1528 = vmul.f32 %v1523, 1.442695
    %v1529 = vpow.pop %v1528
    %v1530 = vsub.f32 %v1527, 1.0
    %v1531 = vsub.f32 %v1529, 1.0
    %v1532 = vsel %vm1524, %v1522, %v1530
    %v1533 = vsel %vm1525, %v1523, %v1531
    %v1534 = vmul.f32 %v1532, %v347
    %v1535 = vmul.f32 %v1533, %v348
    %1536 = vmatprep.subr.mxu0 0.0
    %1537 = vmatpush1.msra.mxu0 %v839
    %1538 = vmatprep.subr.mxu0 0.0
    %1539 = vmatpush1.msra.mxu0 %v840
    %1540 = vmatprep.subr.mxu0 0.0
    %1541 = vmatpush1.msra.mxu0 %v841
    %1542 = vmatprep.subr.mxu0 0.0
    %1543 = vmatpush1.msra.mxu0 %v842
    %1544 = vmatprep.subr.mxu0 0.0
    %1545 = vmatpush1.msra.mxu0 %v843
    %1546 = vmatprep.subr.mxu0 0.0
    %1547 = vmatpush1.msra.mxu0 %v844
    %1548 = vmatprep.subr.mxu0 0.0
    %1549 = vmatpush1.msra.mxu0 %v845
    %1550 = vmatprep.subr.mxu0 0.0
    %1551 = vmatpush1.msra.mxu0 %v846
    %1552 = vmatprep.subr.mxu0 0.0
    %1553 = vmatpush1.msra.mxu0 %v847
    %1554 = vmatprep.subr.mxu0 0.0
    %1555 = vmatpush1.msra.mxu0 %v848
    %1556 = vmatprep.subr.mxu0 0.0
    %1557 = vmatpush1.msra.mxu0 %v849
    %1558 = vmatprep.subr.mxu0 0.0
    %1559 = vmatpush1.msra.mxu0 %v850
    %1560 = vmatprep.subr.mxu0 0.0
    %1561 = vmatpush1.msra.mxu0 %v851
    %1562 = vmatprep.subr.mxu0 0.0
    %1563 = vmatpush1.msra.mxu0 %v852
    %1564 = vmatprep.subr.mxu0 0.0
    %1565 = vmatpush1.msra.mxu0 %v853
    %1566 = vmatprep.subr.mxu0 0.0
    %1567 = vmatpush1.msra.mxu0 %v854
    %1568 = vmatprep.subr.mxu0 0.0
    %1569 = vmatpush1.msra.mxu0 0.0
    %1570 = vmatprep.subr.mxu0 0.0
    %1571 = vmatpush1.msra.mxu0 0.0
    %1572 = vmatprep.subr.mxu0 0.0
    %1573 = vmatpush1.msra.mxu0 0.0
    %1574 = vmatprep.subr.mxu0 0.0
    %1575 = vmatpush1.msra.mxu0 0.0
    %1576 = vmatprep.subr.mxu0 0.0
    %1577 = vmatpush1.msra.mxu0 0.0
    %1578 = vmatprep.subr.mxu0 0.0
    %1579 = vmatpush1.msra.mxu0 0.0
    %1580 = vmatprep.subr.mxu0 0.0
    %1581 = vmatpush1.msra.mxu0 0.0
    %1582 = vmatprep.subr.mxu0 0.0
    %1583 = vmatpush1.msra.mxu0 0.0
    %1584 = vmatprep.subr.mxu0 0.0
    %1585 = vmatpush1.msra.mxu0 0.0
    %1586 = vmatprep.subr.mxu0 0.0
    %1587 = vmatpush1.msra.mxu0 0.0
    %1588 = vmatprep.subr.mxu0 0.0
    %1589 = vmatpush1.msra.mxu0 0.0
    %1590 = vmatprep.subr.mxu0 0.0
    %1591 = vmatpush1.msra.mxu0 0.0
    %1592 = vmatprep.subr.mxu0 0.0
    %1593 = vmatpush1.msra.mxu0 0.0
    %1594 = vmatprep.subr.mxu0 0.0
    %1595 = vmatpush1.msra.mxu0 0.0
    %1596 = vmatprep.subr.mxu0 0.0
    %1597 = vmatpush1.msra.mxu0 0.0
    %1598 = vmatprep.subr.mxu0 0.0
    %1599 = vmatpush1.msra.mxu0 0.0
    %1600 = vmatprep.mubr.f32.mxu0 0.0
    %1601 = vmatmul.mubr.f32.gmra.mrb[0].mxu0 %v1534
    %v1602 = vpop.f32.mrb[0].mxu0
    %v1603 = vadd.f32 %v368, %v1602
    %v1604 = vpop.f32.mrb[0].mxu0
    %1605 = vmatprep.mubr.f32.mxu0 0.0
    %1606 = vmatmul.mubr.f32.gmra.mrb[0].mxu0 %v1535
    %v1607 = vpop.f32.mrb[0].mxu0
    %v1608 = vadd.f32 %v369, %v1607
    %v1609 = vpop.f32.mrb[0].mxu0
    %1610 = vdwg.mxu0
    %v1611 = vand.u32 2147483647, %v1603
    %v1612 = vand.u32 2147483647, %v1608
    %v1613 = vadd.f32 %v1518, %v1611
    %v1614 = vadd.f32 %v1519, %v1612
    %v1615 = vmul.f32 %v1613, 0.125
    %v1616 = vmul.f32 %v1614, 0.125
    %v1617 = vadd.f32 %v1615, 1.0
    %v1618 = vadd.f32 %v1616, 1.0
    %vm1619 = vcmask 31744
    %1620 = vst.msk [vmem:[%s8] sm:$0xff] %vm1619, %v1617
    %1621 = vst.msk [vmem:[%s8 + $0x8] sm:$0xff] %vm1619, %v1618
    // Predicated region
    $region42: #{tpu_custom_call.1} parent=1 // pred_check
      _
    $region43: #{tpu_custom_call.1} parent=1 // pred_check_branch
      %1623 = sbr.rel (0) target = $region45
    $region44: #{tpu_custom_call.1} parent=1 // pred_region
      _
    $region45: #{tpu_custom_call.1} parent=1 // pred_fallthru
      _
    // Predicated region
    $region46: #{tpu_custom_call.1} parent=1 // pred_check
      _
    $region47: #{tpu_custom_call.1} parent=1 // pred_check_branch
      %1625 = sbr.rel (0) target = $region49
    $region48: #{tpu_custom_call.1} parent=1 // pred_region
      _
    $region49: #{tpu_custom_call.1} parent=1 // pred_fallthru
      _
    %1626 = vsyncpa [#allocation4], 1
    %1627 = vsyncpa [#allocation6], 1

</llo_original>
